<compile_context>
chip_gen: v5e
topology: v5e:2x2
jax: 0.10.0
libtpu: 0.0.40
codegen_flags: <defaults>
</compile_context>

<pallas_src>
import functools

import jax
import jax.numpy as jnp
from jax import lax
from jax.experimental import pallas as pl
from jax.experimental.pallas import tpu as pltpu


def _attend(q, k, v, wo, bo, mask, *, heads, key_dim, value_dim):
    """Per-image attention core.  q/k: (heads*kd, N), v: (heads*vd, N), f32.

    key_dim**-0.25 is already folded into the projections.  Returns the
    (C_out, N) f32 result of the to_out 1x1 conv.
    """
    # k softmax over the spatial axis (lanes) == torch k.softmax(dim=-1).
    k = jnp.exp(k - jnp.max(k, axis=-1, keepdims=True))
    k = k * pl.reciprocal(jnp.sum(k, axis=-1, keepdims=True), approx=True)

    # q softmax over the per-head feature axis == torch q.softmax(dim=-2)
    # (norm_queries=True).
    q3 = q.reshape(heads, key_dim, -1)
    q3 = jnp.exp(q3 - jnp.max(q3, axis=1, keepdims=True))
    q3 = q3 * pl.reciprocal(jnp.sum(q3, axis=1, keepdims=True), approx=True)

    # Every MXU input in bf16, f32 accumulation (post-softmax k in [0,1] and v
    # is a bf16-projected activation, so nothing is lost at the stated tol).
    kb = k.astype(jnp.bfloat16)
    vb = v.astype(jnp.bfloat16)

    if heads >= 4:
        # Batched per-head contraction: only heads * kd * vd * N useful MACs.
        k3 = kb.reshape(heads, key_dim, -1)
        v3 = vb.reshape(heads, value_dim, -1)
        ctx = lax.dot_general(k3, v3, (((2,), (2,)), ((0,), (0,))),
                              preferred_element_type=jnp.float32)    # (h,kd,vd)
        out3 = lax.dot_general(ctx.astype(jnp.bfloat16), q3.astype(jnp.bfloat16),
                               (((1,), (1,)), ((0,), (0,))),
                               preferred_element_type=jnp.float32)   # (h,vd,N)
        out_h = out3.reshape(heads * value_dim, -1)
    else:
        # Fused form: one (hk, hv) matmul + block-diagonal head mask.  Better
        # MXU fill than tiny per-head tiles when heads is small.
        qb = q3.reshape(heads * key_dim, -1).astype(jnp.bfloat16)
        ctx = lax.dot_general(kb, vb, (((1,), (1,)), ((), ())),
                              preferred_element_type=jnp.float32)    # (hk, hv)
        ctx = ctx * mask
        # out[e, n] = sum_d ctx[d, e] * q[d, n]; contract dim 0 of both sides
        # so no explicit transpose is materialized.
        out_h = lax.dot_general(ctx.astype(jnp.bfloat16), qb,
                                (((0,), (0,)), ((), ())),
                                preferred_element_type=jnp.float32)  # (hv, N)

    # Final 1x1 conv (to_out).
    return jnp.dot(wo, out_h.astype(jnp.bfloat16),
                   preferred_element_type=jnp.float32) + bo


def _cross_kernel(x_ref, y_ref, wq_ref, bq_ref, wkv_ref, bkv_ref,
                  wo_ref, bo_ref, mask_ref, out_ref,
                  *, heads, key_dim, value_dim, tb):
    ck = heads * key_dim
    wq, bq = wq_ref[...], bq_ref[...]
    wkv, bkv = wkv_ref[...], bkv_ref[...]
    wo, bo = wo_ref[...], bo_ref[...]
    mask = mask_ref[...]
    # Multi-image block: static unrolled loop amortizes per-grid-step overhead
    # and keeps the (small) weights resident across more work.
    for t in range(tb):
        x = x_ref[t].astype(jnp.bfloat16)     # f32 HBM read, in-kernel cast
        y = y_ref[t].astype(jnp.bfloat16)
        q = jnp.dot(wq, x, preferred_element_type=jnp.float32) + bq
        kv = jnp.dot(wkv, y, preferred_element_type=jnp.float32) + bkv
        out = _attend(q, kv[:ck], kv[ck:], wo, bo, mask,
                      heads=heads, key_dim=key_dim, value_dim=value_dim)
        out_ref[t] = out.astype(out_ref.dtype)


def _self_kernel(x_ref, wqkv_ref, bqkv_ref, wo_ref, bo_ref, mask_ref, out_ref,
                 *, heads, key_dim, value_dim, tb):
    # Self-attention fast path (y is x): one stacked projection, input DMA'd once.
    ck = heads * key_dim
    wqkv, bqkv = wqkv_ref[...], bqkv_ref[...]
    wo, bo = wo_ref[...], bo_ref[...]
    mask = mask_ref[...]
    for t in range(tb):
        x = x_ref[t].astype(jnp.bfloat16)
        qkv = jnp.dot(wqkv, x, preferred_element_type=jnp.float32) + bqkv
        out = _attend(qkv[:ck], qkv[ck:2 * ck], qkv[2 * ck:], wo, bo, mask,
                      heads=heads, key_dim=key_dim, value_dim=value_dim)
        out_ref[t] = out.astype(out_ref.dtype)


def _pick_tb(b, max_tb=8):
    """Images per grid step: largest divisor of b that still leaves >= 2 grid
    steps (so a v7x megacore 'parallel' axis has work for both TCs)."""
    best = 1
    for t in range(1, min(b, max_tb) + 1):
        if b % t == 0 and (b // t >= 2 or b == 1):
            best = t
    return best


def _vmem_limit_bytes(per_step_bytes):
    """Scale the scoped-VMEM cap with the working set, staying under the
    generation's physical VMEM (v7x: 64 MiB, v5e/v6e: 128 MiB) with headroom."""
    try:
        phys = int(pltpu.get_tpu_info().vmem_capacity_bytes)
    except Exception:
        phys = 64 * 1024 * 1024  # conservative (v7x) if the query is unavailable
    want = max(32 * 1024 * 1024, 4 * int(per_step_bytes))
    return int(max(32 * 1024 * 1024, min(want, phys - 16 * 1024 * 1024)))


def patch_linear_attention(x, y, params, *, heads, key_dim, value_dim,
                           out_dtype=jnp.float32, tb=None, self_attention=None):
    """x, y: NCHW float32 (b, c, h, w).  Returns NCHW output in `out_dtype`."""
    wq, bq, wk, bk, wv, bv, wo, bo = params
    b, c, h, w = x.shape
    n = h * w
    ck = heads * key_dim
    cv = heads * value_dim
    co = wo.shape[0]
    scale = float(key_dim) ** (-0.25)

    if self_attention is None:
        self_attention = y is x
    if tb is None:
        tb = _pick_tb(b)
    assert b % tb == 0, "batch must be divisible by images-per-step (tb)"
    grid = (b // tb,)

    # NCHW -> (b, C, N): pure reshape, no transpose.  Inputs stay f32; the
    # bf16 cast happens inside the kernel right before the matmuls.
    xf = x.reshape(b, c, n)

    wo_b = wo.astype(jnp.bfloat16)
    bo_b = bo.astype(jnp.float32)[:, None]

    # Block-diagonal head mask (used only on the fused small-heads path).
    head_d = jnp.repeat(jnp.arange(heads), key_dim)
    head_e = jnp.repeat(jnp.arange(heads), value_dim)
    mask = (head_d[:, None] == head_e[None, :]).astype(jnp.float32)

    def const_spec(arr):
        nd = arr.ndim
        return pl.BlockSpec(arr.shape, lambda i, _nd=nd: (0,) * _nd)

    img_spec = pl.BlockSpec((tb, c, n), lambda i: (i, 0, 0))
    out_spec = pl.BlockSpec((tb, co, n), lambda i: (i, 0, 0))
    out_shape = jax.ShapeDtypeStruct((b, co, n), out_dtype)

    # Advisory cost estimate so XLA schedules the surrounding ops sensibly.
    attn_mults = key_dim * value_dim * (heads * heads if heads < 4 else heads)
    flops = 2 * b * n * ((2 * ck + cv) * c + co * cv + 2 * attn_mults)
    trans = 2 * b * n * ck                               # exps of both softmaxes
    in_bytes = b * c * n * 4 * (1 if self_attention else 2)
    out_bytes = b * co * n * jnp.dtype(out_dtype).itemsize
    w_bytes = 2 * ((2 * ck + cv) * c + co * cv) + 4 * (ck * cv + 2 * ck + cv + co)
    cost = pl.CostEstimate(flops=int(flops), transcendentals=int(trans),
                           bytes_accessed=int(in_bytes + out_bytes + w_bytes))

    per_step_bytes = (tb * c * n * 4 * (1 if self_attention else 2)
                      + tb * co * n * jnp.dtype(out_dtype).itemsize
                      + (2 * ck + 2 * cv) * n * 4)       # live f32 intermediates
    cparams = pltpu.CompilerParams(
        dimension_semantics=("parallel",),
        vmem_limit_bytes=_vmem_limit_bytes(per_step_bytes))

    # TODO(synk): for large feature maps (real channel counts with N >~ 16-32K,
    # especially v7x's 64 MiB VMEM) add an N-tiling grid axis: pass 1
    # accumulates ctx and the k-softmax stats online over "arbitrary" N tiles,
    # pass 2 applies the q-softmax + out_h + to_out per tile.  Whole-image
    # (C, N) blocks are fine at patch-attention sizes on all generations.
    # (v5e note: if xprof shows exposed input DMA at large N, add
    # pipeline_mode=pl.Buffered(3) to the image BlockSpecs.)

    if self_attention:
        wqkv = jnp.concatenate([wq * scale, wk * scale, wv], axis=0).astype(jnp.bfloat16)
        bqkv = jnp.concatenate([bq * scale, bk * scale, bv],
                               axis=0).astype(jnp.float32)[:, None]
        kernel = functools.partial(_self_kernel, heads=heads, key_dim=key_dim,
                                   value_dim=value_dim, tb=tb)
        out_flat = pl.pallas_call(
            kernel, out_shape=out_shape, grid=grid,
            in_specs=[img_spec, const_spec(wqkv), const_spec(bqkv),
                      const_spec(wo_b), const_spec(bo_b), const_spec(mask)],
            out_specs=out_spec,
            compiler_params=cparams, cost_estimate=cost,
        )(xf, wqkv, bqkv, wo_b, bo_b, mask)
    else:
        yf = y.reshape(b, c, n)
        wq_s = (wq * scale).astype(jnp.bfloat16)
        bq_s = (bq * scale).astype(jnp.float32)[:, None]
        wkv = jnp.concatenate([wk * scale, wv], axis=0).astype(jnp.bfloat16)
        bkv = jnp.concatenate([bk * scale, bv], axis=0).astype(jnp.float32)[:, None]
        kernel = functools.partial(_cross_kernel, heads=heads, key_dim=key_dim,
                                   value_dim=value_dim, tb=tb)
        out_flat = pl.pallas_call(
            kernel, out_shape=out_shape, grid=grid,
            in_specs=[img_spec, img_spec,
                      const_spec(wq_s), const_spec(bq_s),
                      const_spec(wkv), const_spec(bkv),
                      const_spec(wo_b), const_spec(bo_b), const_spec(mask)],
            out_specs=out_spec,
            compiler_params=cparams, cost_estimate=cost,
        )(xf, yf, wq_s, bq_s, wkv, bkv, wo_b, bo_b, mask)

    return out_flat.reshape(b, co, h, w)


def _reference(x, y, params, *, heads, key_dim, value_dim):
    """Pure-JAX f32 port of the PyTorch forward (context=None branch)."""
    wq, bq, wk, bk, wv, bv, wo, bo = params
    b, c, h, w = x.shape

    def conv1x1(t, wmat, bvec):
        return jnp.einsum('bchw,oc->bohw', t, wmat) + bvec[None, :, None, None]

    q = conv1x1(x, wq, bq)
    k = conv1x1(y, wk, bk)
    v = conv1x1(y, wv, bv)
    q = q.reshape(b, heads, key_dim, h * w)
    k = k.reshape(b, heads, key_dim, h * w)
    v = v.reshape(b, heads, value_dim, h * w)
    scale = key_dim ** (-0.25)
    q = q * scale
    k = k * scale
    k = jax.nn.softmax(k, axis=-1)
    q = jax.nn.softmax(q, axis=-2)
    ctx = jnp.einsum('bhdn,bhen->bhde', k, v)
    out = jnp.einsum('bhdn,bhde->bhen', q, ctx)
    out = out.reshape(b, heads * value_dim, h, w)
    return conv1x1(out, wo, bo)


if __name__ == "__main__":
    def make_params(key, chan, chan_out, key_dim, value_dim, heads):
        ks = jax.random.split(key, 8)
        wq = 0.1 * jax.random.normal(ks[0], (key_dim * heads, chan), jnp.float32)
        bq = 0.1 * jax.random.normal(ks[1], (key_dim * heads,), jnp.float32)
        wk = 0.1 * jax.random.normal(ks[2], (key_dim * heads, chan), jnp.float32)
        bk = 0.1 * jax.random.normal(ks[3], (key_dim * heads,), jnp.float32)
        wv = 0.1 * jax.random.normal(ks[4], (value_dim * heads, chan), jnp.float32)
        bv = 0.1 * jax.random.normal(ks[5], (value_dim * heads,), jnp.float32)
        wo = 0.1 * jax.random.normal(ks[6], (chan_out, value_dim * heads), jnp.float32)
        bo = 0.1 * jax.random.normal(ks[7], (chan_out,), jnp.float32)
        return (wq, bq, wk, bk, wv, bv, wo, bo)

    root = jax.random.PRNGKey(0)
    k_par, k_x, k_y, k_par2, k_x2, k_y2 = jax.random.split(root, 6)

    # --- Test 1: cross-attention, heads=2 (fused block-diag path).
    # batch=4 -> tb=2 images per grid step, grid=(2,) so both v7x TCs get work.
    batch, chan, hh, ww = 4, 32, 16, 16
    key_dim, value_dim, heads = 16, 16, 2
    params = make_params(k_par, chan, chan, key_dim, value_dim, heads)
    x = jax.random.normal(k_x, (batch, chan, hh, ww), jnp.float32)
    y = jax.random.normal(k_y, (batch, chan, hh, ww), jnp.float32)
    out = jax.block_until_ready(
        patch_linear_attention(x, y, params, heads=heads, key_dim=key_dim,
                               value_dim=value_dim))
    ref = _reference(x, y, params, heads=heads, key_dim=key_dim, value_dim=value_dim)
    assert out.shape == (batch, chan, hh, ww)
    assert jnp.allclose(out, ref, atol=1e-2, rtol=1e-2), "cross-attn mismatch"

    # --- Test 2: self-attention fast path (y is x) + bf16 output writeback.
    out_self = jax.block_until_ready(
        patch_linear_attention(x, x, params, heads=heads, key_dim=key_dim,
                               value_dim=value_dim, out_dtype=jnp.bfloat16))
    ref_self = _reference(x, x, params, heads=heads, key_dim=key_dim,
                          value_dim=value_dim)
    assert out_self.dtype == jnp.bfloat16
    assert jnp.allclose(out_self.astype(jnp.float32), ref_self,
                        atol=2.5e-2, rtol=2.5e-2), "self-attn mismatch"

    # --- Test 3: heads=4 -> batched per-head contraction path.
    chan2, kd2, vd2, heads2 = 32, 8, 8, 4
    params2 = make_params(k_par2, chan2, chan2, kd2, vd2, heads2)
    x2 = jax.random.normal(k_x2, (2, chan2, hh, ww), jnp.float32)
    y2 = jax.random.normal(k_y2, (2, chan2, hh, ww), jnp.float32)
    out2 = jax.block_until_ready(
        patch_linear_attention(x2, y2, params2, heads=heads2, key_dim=kd2,
                               value_dim=vd2))
    ref2 = _reference(x2, y2, params2, heads=heads2, key_dim=kd2, value_dim=vd2)
    assert jnp.allclose(out2, ref2, atol=1e-2, rtol=1e-2), "batched-heads mismatch"

    print("KERNEL_OK")
</pallas_src>

<mosaic_0001>
module attributes {stable_mosaic.version = 11 : i64} {
  func.func @_cross_kernel(%arg0: i32, %arg1: memref<2x32x256xf32, #tpu.memory_space<vmem>>, %arg2: memref<2x32x256xf32, #tpu.memory_space<vmem>>, %arg3: memref<32x32xbf16, #tpu.memory_space<vmem>>, %arg4: memref<32x1xf32, #tpu.memory_space<vmem>>, %arg5: memref<64x32xbf16, #tpu.memory_space<vmem>>, %arg6: memref<64x1xf32, #tpu.memory_space<vmem>>, %arg7: memref<32x32xbf16, #tpu.memory_space<vmem>>, %arg8: memref<32x1xf32, #tpu.memory_space<vmem>>, %arg9: memref<32x32xf32, #tpu.memory_space<vmem>>, %arg10: memref<2x32x256xf32, #tpu.memory_space<vmem>>) attributes {dimension_semantics = [#tpu.dimension_semantics<parallel>], iteration_bounds = array<i64: 2>, scalar_prefetch = 0 : i64, scratch_operands = 0 : i64, tpu.core_type = #tpu.core_type<tc>, window_params = [{transform_indices = @transform_0, window_bounds = array<i64: 2, 32, 256>}, {transform_indices = @transform_1, window_bounds = array<i64: 2, 32, 256>}, {pipeline_mode = #tpu.pipeline_mode<synchronous>, transform_indices = @transform_2, window_bounds = array<i64: 32, 32>}, {pipeline_mode = #tpu.pipeline_mode<synchronous>, transform_indices = @transform_3, window_bounds = array<i64: 32, 1>}, {pipeline_mode = #tpu.pipeline_mode<synchronous>, transform_indices = @transform_4, window_bounds = array<i64: 64, 32>}, {pipeline_mode = #tpu.pipeline_mode<synchronous>, transform_indices = @transform_5, window_bounds = array<i64: 64, 1>}, {pipeline_mode = #tpu.pipeline_mode<synchronous>, transform_indices = @transform_6, window_bounds = array<i64: 32, 32>}, {pipeline_mode = #tpu.pipeline_mode<synchronous>, transform_indices = @transform_7, window_bounds = array<i64: 32, 1>}, {pipeline_mode = #tpu.pipeline_mode<synchronous>, transform_indices = @transform_8, window_bounds = array<i64: 32, 32>}, {transform_indices = @transform_9, window_bounds = array<i64: 2, 32, 256>}]} {
    %c0 = arith.constant 0 : index
    %c0_0 = arith.constant 0 : index
    %0 = vector.load %arg3[%c0, %c0_0] : memref<32x32xbf16, #tpu.memory_space<vmem>>, vector<32x32xbf16>
    %c0_1 = arith.constant 0 : index
    %c0_2 = arith.constant 0 : index
    %1 = vector.load %arg4[%c0_1, %c0_2] : memref<32x1xf32, #tpu.memory_space<vmem>>, vector<32x1xf32>
    %c0_3 = arith.constant 0 : index
    %c0_4 = arith.constant 0 : index
    %2 = vector.load %arg5[%c0_3, %c0_4] : memref<64x32xbf16, #tpu.memory_space<vmem>>, vector<64x32xbf16>
    %c0_5 = arith.constant 0 : index
    %c0_6 = arith.constant 0 : index
    %3 = vector.load %arg6[%c0_5, %c0_6] : memref<64x1xf32, #tpu.memory_space<vmem>>, vector<64x1xf32>
    %c0_7 = arith.constant 0 : index
    %c0_8 = arith.constant 0 : index
    %4 = vector.load %arg7[%c0_7, %c0_8] : memref<32x32xbf16, #tpu.memory_space<vmem>>, vector<32x32xbf16>
    %c0_9 = arith.constant 0 : index
    %c0_10 = arith.constant 0 : index
    %5 = vector.load %arg8[%c0_9, %c0_10] : memref<32x1xf32, #tpu.memory_space<vmem>>, vector<32x1xf32>
    %c0_11 = arith.constant 0 : index
    %c0_12 = arith.constant 0 : index
    %6 = vector.load %arg9[%c0_11, %c0_12] : memref<32x32xf32, #tpu.memory_space<vmem>>, vector<32x32xf32>
    %c0_13 = arith.constant 0 : index
    %c0_14 = arith.constant 0 : index
    %c0_15 = arith.constant 0 : index
    %7 = vector.load %arg1[%c0_13, %c0_14, %c0_15] : memref<2x32x256xf32, #tpu.memory_space<vmem>>, vector<1x32x256xf32>
    %8 = vector.shape_cast %7 : vector<1x32x256xf32> to vector<32x256xf32>
    %9 = arith.truncf %8 : vector<32x256xf32> to vector<32x256xbf16>
    %c0_16 = arith.constant 0 : index
    %c0_17 = arith.constant 0 : index
    %c0_18 = arith.constant 0 : index
    %10 = vector.load %arg2[%c0_16, %c0_17, %c0_18] : memref<2x32x256xf32, #tpu.memory_space<vmem>>, vector<1x32x256xf32>
    %11 = vector.shape_cast %10 : vector<1x32x256xf32> to vector<32x256xf32>
    %12 = arith.truncf %11 : vector<32x256xf32> to vector<32x256xbf16>
    %cst = arith.constant dense<0.000000e+00> : vector<32x256xf32>
    %13 = tpu.matmul %0, %9, %cst {dimension_numbers = #tpu.dot_dimension_numbers<[1], [0], [0], [1], [0, 0, 1, 1], [], []>} : vector<32x32xbf16>, vector<32x256xbf16>, vector<32x256xf32> -> vector<32x256xf32>
    %14 = vector.broadcast %1 : vector<32x1xf32> to vector<32x256xf32>
    %15 = arith.addf %13, %14 : vector<32x256xf32>
    %cst_19 = arith.constant dense<0.000000e+00> : vector<64x256xf32>
    %16 = tpu.matmul %2, %12, %cst_19 {dimension_numbers = #tpu.dot_dimension_numbers<[1], [0], [0], [1], [0, 0, 1, 1], [], []>} : vector<64x32xbf16>, vector<32x256xbf16>, vector<64x256xf32> -> vector<64x256xf32>
    %17 = vector.broadcast %3 : vector<64x1xf32> to vector<64x256xf32>
    %18 = arith.addf %16, %17 : vector<64x256xf32>
    %19 = vector.extract_strided_slice %18 {offsets = [0, 0], sizes = [32, 256], strides = [1, 1]} : vector<64x256xf32> to vector<32x256xf32>
    %20 = vector.extract_strided_slice %18 {offsets = [32, 0], sizes = [32, 256], strides = [1, 1]} : vector<64x256xf32> to vector<32x256xf32>
    %cst_20 = arith.constant dense<0xFF800000> : vector<32xf32>
    %21 = vector.multi_reduction <maximumf>, %19, %cst_20 [1] : vector<32x256xf32> to vector<32xf32>
    %22 = vector.shape_cast %21 : vector<32xf32> to vector<32x1xf32>
    %23 = vector.broadcast %22 : vector<32x1xf32> to vector<32x256xf32>
    %24 = arith.subf %19, %23 : vector<32x256xf32>
    %25 = math.exp %24 : vector<32x256xf32>
    %cst_21 = arith.constant dense<0.000000e+00> : vector<32xf32>
    %26 = vector.multi_reduction <add>, %25, %cst_21 [1] : vector<32x256xf32> to vector<32xf32>
    %27 = vector.shape_cast %26 : vector<32xf32> to vector<32x1xf32>
    %28 = tpu.reciprocal %27 {approx = true} : vector<32x1xf32> -> vector<32x1xf32>
    %29 = vector.broadcast %28 : vector<32x1xf32> to vector<32x256xf32>
    %30 = arith.mulf %25, %29 : vector<32x256xf32>
    %31 = vector.shape_cast %15 : vector<32x256xf32> to vector<2x16x256xf32>
    %cst_22 = arith.constant dense<0xFF800000> : vector<2x256xf32>
    %32 = vector.multi_reduction <maximumf>, %31, %cst_22 [1] : vector<2x16x256xf32> to vector<2x256xf32>
    %33 = vector.shape_cast %32 : vector<2x256xf32> to vector<2x1x256xf32>
    %34 = vector.broadcast %33 : vector<2x1x256xf32> to vector<2x16x256xf32>
    %35 = arith.subf %31, %34 : vector<2x16x256xf32>
    %36 = math.exp %35 : vector<2x16x256xf32>
    %cst_23 = arith.constant dense<0.000000e+00> : vector<2x256xf32>
    %37 = vector.multi_reduction <add>, %36, %cst_23 [1] : vector<2x16x256xf32> to vector<2x256xf32>
    %38 = vector.shape_cast %37 : vector<2x256xf32> to vector<2x1x256xf32>
    %39 = tpu.reciprocal %38 {approx = true} : vector<2x1x256xf32> -> vector<2x1x256xf32>
    %40 = vector.broadcast %39 : vector<2x1x256xf32> to vector<2x16x256xf32>
    %41 = arith.mulf %36, %40 : vector<2x16x256xf32>
    %42 = arith.truncf %30 : vector<32x256xf32> to vector<32x256xbf16>
    %43 = arith.truncf %20 : vector<32x256xf32> to vector<32x256xbf16>
    %44 = vector.shape_cast %41 : vector<2x16x256xf32> to vector<32x256xf32>
    %45 = arith.truncf %44 : vector<32x256xf32> to vector<32x256xbf16>
    %cst_24 = arith.constant dense<0.000000e+00> : vector<32x32xf32>
    %46 = tpu.matmul %42, %43, %cst_24 {dimension_numbers = #tpu.dot_dimension_numbers<[1], [1], [0], [0], [0, 0, 1, 0], [], []>} : vector<32x256xbf16>, vector<32x256xbf16>, vector<32x32xf32> -> vector<32x32xf32>
    %47 = arith.mulf %46, %6 : vector<32x32xf32>
    %48 = arith.truncf %47 : vector<32x32xf32> to vector<32x32xbf16>
    %cst_25 = arith.constant dense<0.000000e+00> : vector<32x256xf32>
    %49 = tpu.matmul %48, %45, %cst_25 {dimension_numbers = #tpu.dot_dimension_numbers<[0], [0], [1], [1], [0, 1, 1, 1], [], []>} : vector<32x32xbf16>, vector<32x256xbf16>, vector<32x256xf32> -> vector<32x256xf32>
    %50 = arith.truncf %49 : vector<32x256xf32> to vector<32x256xbf16>
    %cst_26 = arith.constant dense<0.000000e+00> : vector<32x256xf32>
    %51 = tpu.matmul %4, %50, %cst_26 {dimension_numbers = #tpu.dot_dimension_numbers<[1], [0], [0], [1], [0, 0, 1, 1], [], []>} : vector<32x32xbf16>, vector<32x256xbf16>, vector<32x256xf32> -> vector<32x256xf32>
    %52 = vector.broadcast %5 : vector<32x1xf32> to vector<32x256xf32>
    %53 = arith.addf %51, %52 : vector<32x256xf32>
    %c0_27 = arith.constant 0 : index
    %c0_28 = arith.constant 0 : index
    %c0_29 = arith.constant 0 : index
    %54 = vector.load %arg10[%c0_27, %c0_28, %c0_29] : memref<2x32x256xf32, #tpu.memory_space<vmem>>, vector<1x32x256xf32>
    %55 = vector.shape_cast %54 : vector<1x32x256xf32> to vector<32x256xf32>
    %56 = vector.shape_cast %53 : vector<32x256xf32> to vector<1x32x256xf32>
    tpu.vector_store %arg10[%c0_27, %c0_28, %c0_29], %56 {strides = array<i32>} : memref<2x32x256xf32, #tpu.memory_space<vmem>>, vector<1x32x256xf32>,
    %c1 = arith.constant 1 : index
    %c0_30 = arith.constant 0 : index
    %c0_31 = arith.constant 0 : index
    %57 = vector.load %arg1[%c1, %c0_30, %c0_31] : memref<2x32x256xf32, #tpu.memory_space<vmem>>, vector<1x32x256xf32>
    %58 = vector.shape_cast %57 : vector<1x32x256xf32> to vector<32x256xf32>
    %59 = arith.truncf %58 : vector<32x256xf32> to vector<32x256xbf16>
    %c1_32 = arith.constant 1 : index
    %c0_33 = arith.constant 0 : index
    %c0_34 = arith.constant 0 : index
    %60 = vector.load %arg2[%c1_32, %c0_33, %c0_34] : memref<2x32x256xf32, #tpu.memory_space<vmem>>, vector<1x32x256xf32>
    %61 = vector.shape_cast %60 : vector<1x32x256xf32> to vector<32x256xf32>
    %62 = arith.truncf %61 : vector<32x256xf32> to vector<32x256xbf16>
    %cst_35 = arith.constant dense<0.000000e+00> : vector<32x256xf32>
    %63 = tpu.matmul %0, %59, %cst_35 {dimension_numbers = #tpu.dot_dimension_numbers<[1], [0], [0], [1], [0, 0, 1, 1], [], []>} : vector<32x32xbf16>, vector<32x256xbf16>, vector<32x256xf32> -> vector<32x256xf32>
    %64 = vector.broadcast %1 : vector<32x1xf32> to vector<32x256xf32>
    %65 = arith.addf %63, %64 : vector<32x256xf32>
    %cst_36 = arith.constant dense<0.000000e+00> : vector<64x256xf32>
    %66 = tpu.matmul %2, %62, %cst_36 {dimension_numbers = #tpu.dot_dimension_numbers<[1], [0], [0], [1], [0, 0, 1, 1], [], []>} : vector<64x32xbf16>, vector<32x256xbf16>, vector<64x256xf32> -> vector<64x256xf32>
    %67 = vector.broadcast %3 : vector<64x1xf32> to vector<64x256xf32>
    %68 = arith.addf %66, %67 : vector<64x256xf32>
    %69 = vector.extract_strided_slice %68 {offsets = [0, 0], sizes = [32, 256], strides = [1, 1]} : vector<64x256xf32> to vector<32x256xf32>
    %70 = vector.extract_strided_slice %68 {offsets = [32, 0], sizes = [32, 256], strides = [1, 1]} : vector<64x256xf32> to vector<32x256xf32>
    %cst_37 = arith.constant dense<0xFF800000> : vector<32xf32>
    %71 = vector.multi_reduction <maximumf>, %69, %cst_37 [1] : vector<32x256xf32> to vector<32xf32>
    %72 = vector.shape_cast %71 : vector<32xf32> to vector<32x1xf32>
    %73 = vector.broadcast %72 : vector<32x1xf32> to vector<32x256xf32>
    %74 = arith.subf %69, %73 : vector<32x256xf32>
    %75 = math.exp %74 : vector<32x256xf32>
    %cst_38 = arith.constant dense<0.000000e+00> : vector<32xf32>
    %76 = vector.multi_reduction <add>, %75, %cst_38 [1] : vector<32x256xf32> to vector<32xf32>
    %77 = vector.shape_cast %76 : vector<32xf32> to vector<32x1xf32>
    %78 = tpu.reciprocal %77 {approx = true} : vector<32x1xf32> -> vector<32x1xf32>
    %79 = vector.broadcast %78 : vector<32x1xf32> to vector<32x256xf32>
    %80 = arith.mulf %75, %79 : vector<32x256xf32>
    %81 = vector.shape_cast %65 : vector<32x256xf32> to vector<2x16x256xf32>
    %cst_39 = arith.constant dense<0xFF800000> : vector<2x256xf32>
    %82 = vector.multi_reduction <maximumf>, %81, %cst_39 [1] : vector<2x16x256xf32> to vector<2x256xf32>
    %83 = vector.shape_cast %82 : vector<2x256xf32> to vector<2x1x256xf32>
    %84 = vector.broadcast %83 : vector<2x1x256xf32> to vector<2x16x256xf32>
    %85 = arith.subf %81, %84 : vector<2x16x256xf32>
    %86 = math.exp %85 : vector<2x16x256xf32>
    %cst_40 = arith.constant dense<0.000000e+00> : vector<2x256xf32>
    %87 = vector.multi_reduction <add>, %86, %cst_40 [1] : vector<2x16x256xf32> to vector<2x256xf32>
    %88 = vector.shape_cast %87 : vector<2x256xf32> to vector<2x1x256xf32>
    %89 = tpu.reciprocal %88 {approx = true} : vector<2x1x256xf32> -> vector<2x1x256xf32>
    %90 = vector.broadcast %89 : vector<2x1x256xf32> to vector<2x16x256xf32>
    %91 = arith.mulf %86, %90 : vector<2x16x256xf32>
    %92 = arith.truncf %80 : vector<32x256xf32> to vector<32x256xbf16>
    %93 = arith.truncf %70 : vector<32x256xf32> to vector<32x256xbf16>
    %94 = vector.shape_cast %91 : vector<2x16x256xf32> to vector<32x256xf32>
    %95 = arith.truncf %94 : vector<32x256xf32> to vector<32x256xbf16>
    %cst_41 = arith.constant dense<0.000000e+00> : vector<32x32xf32>
    %96 = tpu.matmul %92, %93, %cst_41 {dimension_numbers = #tpu.dot_dimension_numbers<[1], [1], [0], [0], [0, 0, 1, 0], [], []>} : vector<32x256xbf16>, vector<32x256xbf16>, vector<32x32xf32> -> vector<32x32xf32>
    %97 = arith.mulf %96, %6 : vector<32x32xf32>
    %98 = arith.truncf %97 : vector<32x32xf32> to vector<32x32xbf16>
    %cst_42 = arith.constant dense<0.000000e+00> : vector<32x256xf32>
    %99 = tpu.matmul %98, %95, %cst_42 {dimension_numbers = #tpu.dot_dimension_numbers<[0], [0], [1], [1], [0, 1, 1, 1], [], []>} : vector<32x32xbf16>, vector<32x256xbf16>, vector<32x256xf32> -> vector<32x256xf32>
    %100 = arith.truncf %99 : vector<32x256xf32> to vector<32x256xbf16>
    %cst_43 = arith.constant dense<0.000000e+00> : vector<32x256xf32>
    %101 = tpu.matmul %4, %100, %cst_43 {dimension_numbers = #tpu.dot_dimension_numbers<[1], [0], [0], [1], [0, 0, 1, 1], [], []>} : vector<32x32xbf16>, vector<32x256xbf16>, vector<32x256xf32> -> vector<32x256xf32>
    %102 = vector.broadcast %5 : vector<32x1xf32> to vector<32x256xf32>
    %103 = arith.addf %101, %102 : vector<32x256xf32>
    %c1_44 = arith.constant 1 : index
    %c0_45 = arith.constant 0 : index
    %c0_46 = arith.constant 0 : index
    %104 = vector.load %arg10[%c1_44, %c0_45, %c0_46] : memref<2x32x256xf32, #tpu.memory_space<vmem>>, vector<1x32x256xf32>
    %105 = vector.shape_cast %104 : vector<1x32x256xf32> to vector<32x256xf32>
    %106 = vector.shape_cast %103 : vector<32x256xf32> to vector<1x32x256xf32>
    tpu.vector_store %arg10[%c1_44, %c0_45, %c0_46], %106 {strides = array<i32>} : memref<2x32x256xf32, #tpu.memory_space<vmem>>, vector<1x32x256xf32>,
    return
  }
  func.func @transform_0(%arg0: i32) -> (i32, i32, i32) {
    %c0_i32 = arith.constant 0 : i32
    %c0_i32_0 = arith.constant 0 : i32
    %c0_i32_1 = arith.constant 0 : i32
    return %arg0, %c0_i32, %c0_i32_0 : i32, i32, i32
  }
  func.func @transform_1(%arg0: i32) -> (i32, i32, i32) {
    %c0_i32 = arith.constant 0 : i32
    %c0_i32_0 = arith.constant 0 : i32
    %c0_i32_1 = arith.constant 0 : i32
    return %arg0, %c0_i32, %c0_i32_0 : i32, i32, i32
  }
  func.func @transform_2(%arg0: i32) -> (i32, i32) {
    %c0_i32 = arith.constant 0 : i32
    %c0_i32_0 = arith.constant 0 : i32
    %c0_i32_1 = arith.constant 0 : i32
    return %c0_i32, %c0_i32_0 : i32, i32
  }
  func.func @transform_3(%arg0: i32) -> (i32, i32) {
    %c0_i32 = arith.constant 0 : i32
    %c0_i32_0 = arith.constant 0 : i32
    %c0_i32_1 = arith.constant 0 : i32
    return %c0_i32, %c0_i32_0 : i32, i32
  }
  func.func @transform_4(%arg0: i32) -> (i32, i32) {
    %c0_i32 = arith.constant 0 : i32
    %c0_i32_0 = arith.constant 0 : i32
    %c0_i32_1 = arith.constant 0 : i32
    return %c0_i32, %c0_i32_0 : i32, i32
  }
  func.func @transform_5(%arg0: i32) -> (i32, i32) {
    %c0_i32 = arith.constant 0 : i32
    %c0_i32_0 = arith.constant 0 : i32
    %c0_i32_1 = arith.constant 0 : i32
    return %c0_i32, %c0_i32_0 : i32, i32
  }
  func.func @transform_6(%arg0: i32) -> (i32, i32) {
    %c0_i32 = arith.constant 0 : i32
    %c0_i32_0 = arith.constant 0 : i32
    %c0_i32_1 = arith.constant 0 : i32
    return %c0_i32, %c0_i32_0 : i32, i32
  }
  func.func @transform_7(%arg0: i32) -> (i32, i32) {
    %c0_i32 = arith.constant 0 : i32
    %c0_i32_0 = arith.constant 0 : i32
    %c0_i32_1 = arith.constant 0 : i32
    return %c0_i32, %c0_i32_0 : i32, i32
  }
  func.func @transform_8(%arg0: i32) -> (i32, i32) {
    %c0_i32 = arith.constant 0 : i32
    %c0_i32_0 = arith.constant 0 : i32
    %c0_i32_1 = arith.constant 0 : i32
    return %c0_i32, %c0_i32_0 : i32, i32
  }
  func.func @transform_9(%arg0: i32) -> (i32, i32, i32) {
    %c0_i32 = arith.constant 0 : i32
    %c0_i32_0 = arith.constant 0 : i32
    %c0_i32_1 = arith.constant 0 : i32
    return %arg0, %c0_i32, %c0_i32_0 : i32, i32, i32
  }
}

</mosaic_0001>

<llo_original>
// kernel: tpu_custom_call.1
$region0: #{tpu_custom_call.1}
  #allocation0 [shape = 'u32[]', space=smem, size = 0x4, offset = 0x4, fixed_abs, tag = 'smem constant byte address 0x4 - core index']
  #allocation1 [shape = 'u32[72,128]{1,0:T(1,128)}', space=vmem, size = 0x9000, scoped, tag = 'internal scratch']
  %s0 = inlined_call_operand.hbm [shape: f32[4,32,256], index: 0, kind: input, shape index: {}]
  %s1 = inlined_call_operand.hbm [shape: f32[4,32,256], index: 1, kind: input, shape index: {}]
  %s2 = inlined_call_operand.vmem [shape: bf16[32,32], index: 2, kind: input, shape index: {}]
  %s3 = inlined_call_operand.vmem [shape: f32[32,1], index: 3, kind: input, shape index: {}]
  %s4 = inlined_call_operand.vmem [shape: bf16[64,32], index: 4, kind: input, shape index: {}]
  %s5 = inlined_call_operand.vmem [shape: f32[64,1], index: 5, kind: input, shape index: {}]
  %s6 = inlined_call_operand.vmem [shape: bf16[32,32], index: 6, kind: input, shape index: {}]
  %s7 = inlined_call_operand.vmem [shape: f32[32,1], index: 7, kind: input, shape index: {}]
  %s8 = inlined_call_operand.vmem [shape: f32[32,32], index: 8, kind: input, shape index: {}]
  %s9 = inlined_call_operand.hbm [shape: f32[4,32,256], index: 9, kind: output, shape index: {}]
  %s10 = sld [smem:[#allocation0]]
  $region77: #{tpu_custom_call.1} parent=0
    _
  %s12 = ssub.s32 1, %s10
  %s13 = scalar_select 0, %s12, %s10
  $region1: #{tpu_custom_call.1} parent=0
    #allocation2 [shape = 'u8[131072]{0}', space=vmem, size = 0x20000, scoped, tag = 'input window, operand 0']
    #allocation3 [shape = 's32[2]{0}', space=sflag, size = 0x8, scoped, tag = 'scoped memory for tpu_custom_call.1']
    #allocation4 [shape = 's32[2]{0}', space=sflag, size = 0x8, scoped, tag = 'scoped memory for tpu_custom_call.1']
    #allocation5 [shape = 'u8[131072]{0}', space=vmem, size = 0x20000, scoped, tag = 'input window, operand 1']
    #allocation6 [shape = 's32[2]{0}', space=sflag, size = 0x8, scoped, tag = 'scoped memory for tpu_custom_call.1']
    #allocation7 [shape = 'u8[131072]{0}', space=vmem, size = 0x20000, scoped, tag = 'output window, operand 0']
    %14 = vsyncpa [#allocation3], 0
    %s15 = scalar_lea.sflag [#allocation3], 1
    %16 = vsyncpa %s15, 0
    %17 = vsyncpa [#allocation6], 0
    %s18 = scalar_lea.sflag [#allocation6], 1
    %19 = vsyncpa %s18, 0
    %20 = vsyncpa [#allocation4], 0
    %s21 = scalar_lea.sflag [#allocation4], 1
    %22 = vsyncpa %s21, 0
    loop: start=0, step=1, limit=4
    $region2: #{tpu_custom_call.1} parent=1 // loop_pre_header
      _
    $region3: #{tpu_custom_call.1} parent=1 // loop_header
      %s24 = sphi 0, %s28
      %p25 = scmp.ge.s32.totalorder %s24, 4
      %s34 = sphi 0, %s36
      %s37 = sphi 0, %s34
      %s38 = sphi 0, %s37
      %s54 = sphi 0, %s38
      %s60 = sphi 0, %s62
      %s63 = sphi 0, %s60
      %s64 = sphi 0, %s63
      %s80 = sphi 0, %s64
      %s84 = sphi 0, %s84
      %s86 = sphi 0, %s84
      %s87 = sphi 0, %s86
      %s101 = sphi 0, %s87
      %s105 = sphi 0, %s105
      %s107 = sphi 0, %s105
      %s108 = sphi 0, %s107
      %s122 = sphi 0, %s108
      %s126 = sphi 0, %s126
      %s128 = sphi 0, %s126
      %s129 = sphi 0, %s128
      %s143 = sphi 0, %s129
      %s147 = sphi 0, %s147
      %s149 = sphi 0, %s147
      %s150 = sphi 0, %s149
      %s164 = sphi 0, %s150
      %s168 = sphi 0, %s168
      %s170 = sphi 0, %s168
      %s171 = sphi 0, %s170
      %s185 = sphi 0, %s171
      %s189 = sphi 0, %s189
      %s191 = sphi 0, %s189
      %s192 = sphi 0, %s191
      %s206 = sphi 0, %s192
      %s210 = sphi 0, %s210
      %s212 = sphi 0, %s210
      %s213 = sphi 0, %s212
      %s227 = sphi 0, %s213
      %s233 = sphi 0, %s235
      %s236 = sphi 0, %s233
      %s237 = sphi 0, %s236
      %s253 = sphi 0, %s237
    $region4: #{tpu_custom_call.1} parent=1 // loop_header_branch
      %27 = sbr.rel (%p25) target = $region8
    $region5: #{tpu_custom_call.1} parent=1 // loop_body
      %s29 = ssub.s32 %s24, 1
      %s30 = ssub.s32 %s24, 2
      %s31 = sadd.s32 %s24, 1
      %s32 = ssub.s32 %s24, %s31
      %p33 = scmp.eq.s32.totalorder %s32, 0
      %s35 = sadd.s32 %s34, 1
      %s36 = scalar_select %p33, %s34, %s35
      %p39 = pneg %p33
      %p40 = scmp.eq.s32.totalorder %s24, 1
      %p41 = por %p39, %p40
      %p42 = scmp.ne.s32.totalorder %s34, %s37
      %p43 = scmp.eq.s32.totalorder %s24, 0
      %p44 = por %p42, %p43
      %p45 = scmp.ne.s32.totalorder %s34, %s37
      %p46 = scmp.eq.s32.totalorder %s29, 1
      %p47 = por %p45, %p46
      %p48 = scmp.ne.s32.totalorder %s37, %s38
      %p49 = scmp.eq.s32.totalorder %s29, 0
      %p50 = por %p48, %p49
      %p51 = scmp.ne.s32.totalorder %s37, %s38
      %p52 = scmp.eq.s32.totalorder %s30, 1
      %p53 = por %p51, %p52
      %p55 = scmp.ne.s32.totalorder %s38, %s54
      %p56 = scmp.eq.s32.totalorder %s30, 0
      %p57 = por %p55, %p56
      %s58 = ssub.s32 %s24, %s31
      %p59 = scmp.eq.s32.totalorder %s58, 0
      %s61 = sadd.s32 %s60, 1
      %s62 = scalar_select %p59, %s60, %s61
      %p65 = pneg %p59
      %p66 = scmp.eq.s32.totalorder %s24, 1
      %p67 = por %p65, %p66
      %p68 = scmp.ne.s32.totalorder %s60, %s63
      %p69 = scmp.eq.s32.totalorder %s24, 0
      %p70 = por %p68, %p69
      %p71 = scmp.ne.s32.totalorder %s60, %s63
      %p72 = scmp.eq.s32.totalorder %s29, 1
      %p73 = por %p71, %p72
      %p74 = scmp.ne.s32.totalorder %s63, %s64
      %p75 = scmp.eq.s32.totalorder %s29, 0
      %p76 = por %p74, %p75
      %p77 = scmp.ne.s32.totalorder %s63, %s64
      %p78 = scmp.eq.s32.totalorder %s30, 1
      %p79 = por %p77, %p78
      %p81 = scmp.ne.s32.totalorder %s64, %s80
      %p82 = scmp.eq.s32.totalorder %s30, 0
      %p83 = por %p81, %p82
      %s85 = sadd.s32 %s84, 1
      %p88 = scmp.eq.s32.totalorder %s24, 1
      %p89 = scmp.ne.s32.totalorder %s84, %s86
      %p90 = scmp.eq.s32.totalorder %s24, 0
      %p91 = por %p89, %p90
      %p92 = scmp.ne.s32.totalorder %s84, %s86
      %p93 = scmp.eq.s32.totalorder %s29, 1
      %p94 = por %p92, %p93
      %p95 = scmp.ne.s32.totalorder %s86, %s87
      %p96 = scmp.eq.s32.totalorder %s29, 0
      %p97 = por %p95, %p96
      %p98 = scmp.ne.s32.totalorder %s86, %s87
      %p99 = scmp.eq.s32.totalorder %s30, 1
      %p100 = por %p98, %p99
      %p102 = scmp.ne.s32.totalorder %s87, %s101
      %p103 = scmp.eq.s32.totalorder %s30, 0
      %p104 = por %p102, %p103
      %s106 = sadd.s32 %s105, 1
      %p109 = scmp.eq.s32.totalorder %s24, 1
      %p110 = scmp.ne.s32.totalorder %s105, %s107
      %p111 = scmp.eq.s32.totalorder %s24, 0
      %p112 = por %p110, %p111
      %p113 = scmp.ne.s32.totalorder %s105, %s107
      %p114 = scmp.eq.s32.totalorder %s29, 1
      %p115 = por %p113, %p114
      %p116 = scmp.ne.s32.totalorder %s107, %s108
      %p117 = scmp.eq.s32.totalorder %s29, 0
      %p118 = por %p116, %p117
      %p119 = scmp.ne.s32.totalorder %s107, %s108
      %p120 = scmp.eq.s32.totalorder %s30, 1
      %p121 = por %p119, %p120
      %p123 = scmp.ne.s32.totalorder %s108, %s122
      %p124 = scmp.eq.s32.totalorder %s30, 0
      %p125 = por %p123, %p124
      %s127 = sadd.s32 %s126, 1
      %p130 = scmp.eq.s32.totalorder %s24, 1
      %p131 = scmp.ne.s32.totalorder %s126, %s128
      %p132 = scmp.eq.s32.totalorder %s24, 0
      %p133 = por %p131, %p132
      %p134 = scmp.ne.s32.totalorder %s126, %s128
      %p135 = scmp.eq.s32.totalorder %s29, 1
      %p136 = por %p134, %p135
      %p137 = scmp.ne.s32.totalorder %s128, %s129
      %p138 = scmp.eq.s32.totalorder %s29, 0
      %p139 = por %p137, %p138
      %p140 = scmp.ne.s32.totalorder %s128, %s129
      %p141 = scmp.eq.s32.totalorder %s30, 1
      %p142 = por %p140, %p141
      %p144 = scmp.ne.s32.totalorder %s129, %s143
      %p145 = scmp.eq.s32.totalorder %s30, 0
      %p146 = por %p144, %p145
      %s148 = sadd.s32 %s147, 1
      %p151 = scmp.eq.s32.totalorder %s24, 1
      %p152 = scmp.ne.s32.totalorder %s147, %s149
      %p153 = scmp.eq.s32.totalorder %s24, 0
      %p154 = por %p152, %p153
      %p155 = scmp.ne.s32.totalorder %s147, %s149
      %p156 = scmp.eq.s32.totalorder %s29, 1
      %p157 = por %p155, %p156
      %p158 = scmp.ne.s32.totalorder %s149, %s150
      %p159 = scmp.eq.s32.totalorder %s29, 0
      %p160 = por %p158, %p159
      %p161 = scmp.ne.s32.totalorder %s149, %s150
      %p162 = scmp.eq.s32.totalorder %s30, 1
      %p163 = por %p161, %p162
      %p165 = scmp.ne.s32.totalorder %s150, %s164
      %p166 = scmp.eq.s32.totalorder %s30, 0
      %p167 = por %p165, %p166
      %s169 = sadd.s32 %s168, 1
      %p172 = scmp.eq.s32.totalorder %s24, 1
      %p173 = scmp.ne.s32.totalorder %s168, %s170
      %p174 = scmp.eq.s32.totalorder %s24, 0
      %p175 = por %p173, %p174
      %p176 = scmp.ne.s32.totalorder %s168, %s170
      %p177 = scmp.eq.s32.totalorder %s29, 1
      %p178 = por %p176, %p177
      %p179 = scmp.ne.s32.totalorder %s170, %s171
      %p180 = scmp.eq.s32.totalorder %s29, 0
      %p181 = por %p179, %p180
      %p182 = scmp.ne.s32.totalorder %s170, %s171
      %p183 = scmp.eq.s32.totalorder %s30, 1
      %p184 = por %p182, %p183
      %p186 = scmp.ne.s32.totalorder %s171, %s185
      %p187 = scmp.eq.s32.totalorder %s30, 0
      %p188 = por %p186, %p187
      %s190 = sadd.s32 %s189, 1
      %p193 = scmp.eq.s32.totalorder %s24, 1
      %p194 = scmp.ne.s32.totalorder %s189, %s191
      %p195 = scmp.eq.s32.totalorder %s24, 0
      %p196 = por %p194, %p195
      %p197 = scmp.ne.s32.totalorder %s189, %s191
      %p198 = scmp.eq.s32.totalorder %s29, 1
      %p199 = por %p197, %p198
      %p200 = scmp.ne.s32.totalorder %s191, %s192
      %p201 = scmp.eq.s32.totalorder %s29, 0
      %p202 = por %p200, %p201
      %p203 = scmp.ne.s32.totalorder %s191, %s192
      %p204 = scmp.eq.s32.totalorder %s30, 1
      %p205 = por %p203, %p204
      %p207 = scmp.ne.s32.totalorder %s192, %s206
      %p208 = scmp.eq.s32.totalorder %s30, 0
      %p209 = por %p207, %p208
      %s211 = sadd.s32 %s210, 1
      %p214 = scmp.eq.s32.totalorder %s24, 1
      %p215 = scmp.ne.s32.totalorder %s210, %s212
      %p216 = scmp.eq.s32.totalorder %s24, 0
      %p217 = por %p215, %p216
      %p218 = scmp.ne.s32.totalorder %s210, %s212
      %p219 = scmp.eq.s32.totalorder %s29, 1
      %p220 = por %p218, %p219
      %p221 = scmp.ne.s32.totalorder %s212, %s213
      %p222 = scmp.eq.s32.totalorder %s29, 0
      %p223 = por %p221, %p222
      %p224 = scmp.ne.s32.totalorder %s212, %s213
      %p225 = scmp.eq.s32.totalorder %s30, 1
      %p226 = por %p224, %p225
      %p228 = scmp.ne.s32.totalorder %s213, %s227
      %p229 = scmp.eq.s32.totalorder %s30, 0
      %p230 = por %p228, %p229
      %s231 = ssub.s32 %s24, %s31
      %p232 = scmp.eq.s32.totalorder %s231, 0
      %s234 = sadd.s32 %s233, 1
      %s235 = scalar_select %p232, %s233, %s234
      %p238 = pneg %p232
      %p239 = scmp.eq.s32.totalorder %s24, 1
      %p240 = por %p238, %p239
      %p241 = scmp.ne.s32.totalorder %s233, %s236
      %p242 = scmp.eq.s32.totalorder %s24, 0
      %p243 = por %p241, %p242
      %p244 = scmp.ne.s32.totalorder %s233, %s236
      %p245 = scmp.eq.s32.totalorder %s29, 1
      %p246 = por %p244, %p245
      %p247 = scmp.ne.s32.totalorder %s236, %s237
      %p248 = scmp.eq.s32.totalorder %s29, 0
      %p249 = por %p247, %p248
      %p250 = scmp.ne.s32.totalorder %s236, %s237
      %p251 = scmp.eq.s32.totalorder %s30, 1
      %p252 = por %p250, %p251
      %p254 = scmp.ne.s32.totalorder %s237, %s253
      %p255 = scmp.eq.s32.totalorder %s30, 0
      %p256 = por %p254, %p255
      %p257 = scmp.le.s32.totalorder 1, %s24
      %p258 = scmp.lt.s32.totalorder %s24, 3
      %p259 = pnand %p257, %p258
      %p260 = pneg %p259
      // Predicated region
      $region9: #{tpu_custom_call.1} parent=5 // pred_check
        _
      $region10: #{tpu_custom_call.1} parent=5 // pred_check_branch
        %262 = sbr.rel (%p259) target = $region12
      $region11: #{tpu_custom_call.1} parent=5 // pred_region
        %s263 = ssub.s32 %s24, 1
        // Predicated region
        $region13: #{tpu_custom_call.1} parent=11 // pred_check
          %p264 = pneg %p97
        $region14: #{tpu_custom_call.1} parent=11 // pred_check_branch
          %266 = sbr.rel (%p264) target = $region16
        $region15: #{tpu_custom_call.1} parent=11 // pred_region
          _
        $region16: #{tpu_custom_call.1} parent=11 // pred_fallthru
          _
        // Predicated region
        $region17: #{tpu_custom_call.1} parent=11 // pred_check
          %p267 = pneg %p118
        $region18: #{tpu_custom_call.1} parent=11 // pred_check_branch
          %269 = sbr.rel (%p267) target = $region20
        $region19: #{tpu_custom_call.1} parent=11 // pred_region
          _
        $region20: #{tpu_custom_call.1} parent=11 // pred_fallthru
          _
        // Predicated region
        $region21: #{tpu_custom_call.1} parent=11 // pred_check
          %p270 = pneg %p139
        $region22: #{tpu_custom_call.1} parent=11 // pred_check_branch
          %272 = sbr.rel (%p270) target = $region24
        $region23: #{tpu_custom_call.1} parent=11 // pred_region
          _
        $region24: #{tpu_custom_call.1} parent=11 // pred_fallthru
          _
        // Predicated region
        $region25: #{tpu_custom_call.1} parent=11 // pred_check
          %p273 = pneg %p160
        $region26: #{tpu_custom_call.1} parent=11 // pred_check_branch
          %275 = sbr.rel (%p273) target = $region28
        $region27: #{tpu_custom_call.1} parent=11 // pred_region
          _
        $region28: #{tpu_custom_call.1} parent=11 // pred_fallthru
          _
        // Predicated region
        $region29: #{tpu_custom_call.1} parent=11 // pred_check
          %p276 = pneg %p181
        $region30: #{tpu_custom_call.1} parent=11 // pred_check_branch
          %278 = sbr.rel (%p276) target = $region32
        $region31: #{tpu_custom_call.1} parent=11 // pred_region
          _
        $region32: #{tpu_custom_call.1} parent=11 // pred_fallthru
          _
        // Predicated region
        $region33: #{tpu_custom_call.1} parent=11 // pred_check
          %p279 = pneg %p202
        $region34: #{tpu_custom_call.1} parent=11 // pred_check_branch
          %281 = sbr.rel (%p279) target = $region36
        $region35: #{tpu_custom_call.1} parent=11 // pred_region
          _
        $region36: #{tpu_custom_call.1} parent=11 // pred_fallthru
          _
        // Predicated region
        $region37: #{tpu_custom_call.1} parent=11 // pred_check
          %p282 = pneg %p223
        $region38: #{tpu_custom_call.1} parent=11 // pred_check_branch
          %284 = sbr.rel (%p282) target = $region40
        $region39: #{tpu_custom_call.1} parent=11 // pred_region
          _
        $region40: #{tpu_custom_call.1} parent=11 // pred_fallthru
          _
      $region12: #{tpu_custom_call.1} parent=5 // pred_fallthru
        _
      %p285 = scmp.lt.s32.totalorder %s24, 2
      // Predicated region
      $region41: #{tpu_custom_call.1} parent=5 // pred_check
        %p286 = pneg %p285
      $region42: #{tpu_custom_call.1} parent=5 // pred_check_branch
        %288 = sbr.rel (%p286) target = $region44
      $region43: #{tpu_custom_call.1} parent=5 // pred_region
        // Predicated region
        $region45: #{tpu_custom_call.1} parent=43 // pred_check
          %p289 = pneg %p44
        $region46: #{tpu_custom_call.1} parent=43 // pred_check_branch
          %291 = sbr.rel (%p289) target = $region48
        $region47: #{tpu_custom_call.1} parent=43 // pred_region
          %s292 = sand.u32 %s34, 1
          %s293 = scalar_lea.sflag [#allocation3], %s292
          %s294 = sand.u32 %s34, 1
          %s295 = smul.addr %s294, 128
          %s296 = scalar_lea.vmem [#allocation2], %s295
          %s297 = smul.u32 2, %s24
          %299 = vsyncadd %s293, 0
          %s300 = smul.addr %s297, 8
          %s301 = smul.addr %s300, 8
          %s302 = scalar_lea.hbm %s0, %s301
          %s303 = sshll.u32 %s302, 4
          %s304 = int_to_ptr.hbm [resolvable:$true] %s303
          %s305 = sshll.u32 %s296, 4
          %s306 = int_to_ptr.vmem [resolvable:$true] %s305
          %311 = dma.hbm_to_vmem [thread:$0]  %s304, 2048, %s306, %s293, 256, 256, 16
        $region48: #{tpu_custom_call.1} parent=43 // pred_fallthru
          _
        // Predicated region
        $region49: #{tpu_custom_call.1} parent=43 // pred_check
          %p312 = pneg %p70
        $region50: #{tpu_custom_call.1} parent=43 // pred_check_branch
          %314 = sbr.rel (%p312) target = $region52
        $region51: #{tpu_custom_call.1} parent=43 // pred_region
          %s315 = sand.u32 %s60, 1
          %s316 = scalar_lea.sflag [#allocation6], %s315
          %s317 = sand.u32 %s60, 1
          %s318 = smul.addr %s317, 128
          %s319 = scalar_lea.vmem [#allocation5], %s318
          %s320 = smul.u32 2, %s24
          %322 = vsyncadd %s316, 0
          %s323 = smul.addr %s320, 8
          %s324 = smul.addr %s323, 8
          %s325 = scalar_lea.hbm %s1, %s324
          %s326 = sshll.u32 %s325, 4
          %s327 = int_to_ptr.hbm [resolvable:$true] %s326
          %s328 = sshll.u32 %s319, 4
          %s329 = int_to_ptr.vmem [resolvable:$true] %s328
          %334 = dma.hbm_to_vmem [thread:$0]  %s327, 2048, %s329, %s316, 256, 256, 16
        $region52: #{tpu_custom_call.1} parent=43 // pred_fallthru
          _
      $region44: #{tpu_custom_call.1} parent=5 // pred_fallthru
        _
      %p335 = scmp.le.s32.totalorder 1, %s24
      %p336 = scmp.lt.s32.totalorder %s24, 3
      %p337 = pnand %p335, %p336
      %p338 = pneg %p337
      // Predicated region
      $region53: #{tpu_custom_call.1} parent=5 // pred_check
        _
      $region54: #{tpu_custom_call.1} parent=5 // pred_check_branch
        %340 = sbr.rel (%p337) target = $region56
      $region55: #{tpu_custom_call.1} parent=5 // pred_region
        %s341 = ssub.s32 %s24, 1
        %s342 = sand.u32 %s37, 1
        %s343 = scalar_lea.sflag [#allocation3], %s342
        %s344 = sand.u32 %s37, 1
        %s345 = smul.addr %s344, 128
        %s346 = scalar_lea.vmem [#allocation2], %s345
        // Predicated region
        $region57: #{tpu_custom_call.1} parent=55 // pred_check
          %p347 = pneg %p50
        $region58: #{tpu_custom_call.1} parent=55 // pred_check_branch
          %349 = sbr.rel (%p347) target = $region60
        $region59: #{tpu_custom_call.1} parent=55 // pred_region
          %351 = dma.done %s343, 2048
        $region60: #{tpu_custom_call.1} parent=55 // pred_fallthru
          _
        %s352 = sand.u32 %s63, 1
        %s353 = scalar_lea.sflag [#allocation6], %s352
        %s354 = sand.u32 %s63, 1
        %s355 = smul.addr %s354, 128
        %s356 = scalar_lea.vmem [#allocation5], %s355
        // Predicated region
        $region61: #{tpu_custom_call.1} parent=55 // pred_check
          %p357 = pneg %p76
        $region62: #{tpu_custom_call.1} parent=55 // pred_check_branch
          %359 = sbr.rel (%p357) target = $region64
        $region63: #{tpu_custom_call.1} parent=55 // pred_region
          %361 = dma.done %s353, 2048
        $region64: #{tpu_custom_call.1} parent=55 // pred_fallthru
          _
        %s362 = sand.u32 %s37, 1
        %s363 = scalar_lea.sflag [#allocation3], %s362
        %s364 = sand.u32 %s37, 1
        %s365 = smul.addr %s364, 128
        %s366 = scalar_lea.vmem [#allocation2], %s365
        %p367 = pneg %p50
        %p368 = pneg %p47
        %s369 = sand.u32 %s63, 1
        %s370 = scalar_lea.sflag [#allocation6], %s369
        %s371 = sand.u32 %s63, 1
        %s372 = smul.addr %s371, 128
        %s373 = scalar_lea.vmem [#allocation5], %s372
        %p374 = pneg %p76
        %p375 = pneg %p73
        %p376 = pneg %p97
        %p377 = pneg %p94
        %p378 = pneg %p118
        %p379 = pneg %p115
        %p380 = pneg %p139
        %p381 = pneg %p136
        %p382 = pneg %p160
        %p383 = pneg %p157
        %p384 = pneg %p181
        %p385 = pneg %p178
        %p386 = pneg %p202
        %p387 = pneg %p199
        %p388 = pneg %p223
        %p389 = pneg %p220
        %p390 = pneg %p249
        %p391 = pneg %p246
        %s392 = sand.u32 %s236, 1
        %s393 = scalar_lea.sflag [#allocation4], %s392
        %s394 = sand.u32 %s236, 1
        %s395 = smul.addr %s394, 128
        %s396 = scalar_lea.vmem [#allocation7], %s395
        %s397 = smul.u32 2, %s29
        %s398 = smul.u32 2, %s29
        %s399 = smul.u32 2, %s29
        %v401 = vld [vmem:[%s2] sm:$0xf]
        %v402 = vld [vmem:[%s2 + $0x4] sm:$0xf]
        %v403 = vld [vmem:[%s2 + $0x8] sm:$0xf]
        %v404 = vld [vmem:[%s2 + $0xc] sm:$0xf]
        %v405 = vld [vmem:[%s3] sm:$0xff]
        %v406 = vld [vmem:[%s3 + $0x8] sm:$0xff]
        %v407 = vld [vmem:[%s3 + $0x10] sm:$0xff]
        %v408 = vld [vmem:[%s3 + $0x18] sm:$0xff]
        %v409 = vld [vmem:[%s4] sm:$0xf]
        %v410 = vld [vmem:[%s4 + $0x4] sm:$0xf]
        %v411 = vld [vmem:[%s4 + $0x8] sm:$0xf]
        %v412 = vld [vmem:[%s4 + $0xc] sm:$0xf]
        %v413 = vld [vmem:[%s4 + $0x10] sm:$0xf]
        %v414 = vld [vmem:[%s4 + $0x14] sm:$0xf]
        %v415 = vld [vmem:[%s4 + $0x18] sm:$0xf]
        %v416 = vld [vmem:[%s4 + $0x1c] sm:$0xf]
        %v417 = vld [vmem:[%s5] sm:$0xff]
        %v418 = vld [vmem:[%s5 + $0x8] sm:$0xff]
        %v419 = vld [vmem:[%s5 + $0x10] sm:$0xff]
        %v420 = vld [vmem:[%s5 + $0x18] sm:$0xff]
        %v421 = vld [vmem:[%s5 + $0x20] sm:$0xff]
        %v422 = vld [vmem:[%s5 + $0x28] sm:$0xff]
        %v423 = vld [vmem:[%s5 + $0x30] sm:$0xff]
        %v424 = vld [vmem:[%s5 + $0x38] sm:$0xff]
        %v425 = vld [vmem:[%s6] sm:$0xf]
        %v426 = vld [vmem:[%s6 + $0x4] sm:$0xf]
        %v427 = vld [vmem:[%s6 + $0x8] sm:$0xf]
        %v428 = vld [vmem:[%s6 + $0xc] sm:$0xf]
        %v429 = vld [vmem:[%s7] sm:$0xff]
        %v430 = vld [vmem:[%s7 + $0x8] sm:$0xff]
        %v431 = vld [vmem:[%s7 + $0x10] sm:$0xff]
        %v432 = vld [vmem:[%s7 + $0x18] sm:$0xff]
        %v433 = vld [vmem:[%s8] sm:$0xff]
        %v434 = vld [vmem:[%s8 + $0x8] sm:$0xff]
        %v435 = vld [vmem:[%s8 + $0x10] sm:$0xff]
        %v436 = vld [vmem:[%s8 + $0x18] sm:$0xff]
        %v437 = vld [vmem:[%s346] sm:$0xff]
        %v438 = vld [vmem:[%s346 + $0x8] sm:$0xff]
        %v439 = vld [vmem:[%s346 + $0x10] sm:$0xff]
        %v440 = vld [vmem:[%s346 + $0x18] sm:$0xff]
        %v441 = vld [vmem:[%s346 + $0x20] sm:$0xff]
        %v442 = vld [vmem:[%s346 + $0x28] sm:$0xff]
        %v443 = vld [vmem:[%s346 + $0x30] sm:$0xff]
        %v444 = vld [vmem:[%s346 + $0x38] sm:$0xff]
        %v445 = vpack.c.bf16 %v439, %v437
        %v446 = vpack.c.bf16 %v440, %v438
        %v447 = vpack.c.bf16 %v443, %v441
        %v448 = vpack.c.bf16 %v444, %v442
        %v449 = vld [vmem:[%s356] sm:$0xff]
        %v450 = vld [vmem:[%s356 + $0x8] sm:$0xff]
        %v451 = vld [vmem:[%s356 + $0x10] sm:$0xff]
        %v452 = vld [vmem:[%s356 + $0x18] sm:$0xff]
        %v453 = vld [vmem:[%s356 + $0x20] sm:$0xff]
        %v454 = vld [vmem:[%s356 + $0x28] sm:$0xff]
        %v455 = vld [vmem:[%s356 + $0x30] sm:$0xff]
        %v456 = vld [vmem:[%s356 + $0x38] sm:$0xff]
        %v457 = vpack.c.bf16 %v451, %v449
        %v458 = vpack.c.bf16 %v452, %v450
        %v459 = vpack.c.bf16 %v455, %v453
        %v460 = vpack.c.bf16 %v456, %v454
        %462 = vset.pattern.permute.xlu0 0
        %463 = vperm.xlu0 %462, %v405
        %v464 = vpop.permute.xlu0 %463
        %467 = vset.pattern.permute.xlu0 0
        %468 = vperm.xlu0 %467, %v406
        %v469 = vpop.permute.xlu0 %468
        %472 = vset.pattern.permute.xlu0 0
        %473 = vperm.xlu0 %472, %v407
        %v474 = vpop.permute.xlu0 %473
        %477 = vset.pattern.permute.xlu0 0
        %478 = vperm.xlu0 %477, %v408
        %v479 = vpop.permute.xlu0 %478
        %v485 = vunpack.c.l.b16 %v401
        %v486 = vunpack.c.l.b16 %v402
        %v487 = vunpack.c.l.b16 %v403
        %v488 = vunpack.c.l.b16 %v404
        %v489 = vpack.c.b16 %v486, %v485
        %v490 = vpack.c.b16 %v488, %v487
        %vm491 = vcmask 261120
        %v493 = vsel %vm491, %v489, 0
        %v496 = vsel %vm491, %v490, 0
        %498 = vmatpush.bf16.msra.mxu0 0
        %499 = vmatpush.bf16.msra.mxu0 0
        %500 = vmatpush.bf16.msra.mxu0 0
        %501 = vmatpush.bf16.msra.mxu0 0
        %502 = vmatpush.bf16.msra.mxu0 0
        %503 = vmatpush.bf16.msra.mxu0 0
        %504 = vmatpush.bf16.msra.mxu0 %v447
        %505 = vmatpush.bf16.msra.mxu0 %v445
        %506 = vmatmul.bf16.gmra.mxu0 %v493
        %v507 = vpop.f32.mrf.mxu0
        %v508 = vadd.f32 %v464, %v507
        %v509 = vpop.f32.mrf.mxu0
        %v510 = vadd.f32 %v469, %v509
        %511 = vmatmul.bf16.gmra.mxu0 %v496
        %v512 = vpop.f32.mrf.mxu0
        %v513 = vadd.f32 %v474, %v512
        %v514 = vpop.f32.mrf.mxu0
        %v515 = vadd.f32 %v479, %v514
        %516 = vdwg.mxu0
        %517 = vmatpush.bf16.msra.mxu0 0
        %518 = vmatpush.bf16.msra.mxu0 0
        %519 = vmatpush.bf16.msra.mxu0 0
        %520 = vmatpush.bf16.msra.mxu0 0
        %521 = vmatpush.bf16.msra.mxu0 0
        %522 = vmatpush.bf16.msra.mxu0 0
        %523 = vmatpush.bf16.msra.mxu0 %v448
        %524 = vmatpush.bf16.msra.mxu0 %v446
        %525 = vmatmul.bf16.gmra.mxu0 %v493
        %v526 = vpop.f32.mrf.mxu0
        %v527 = vadd.f32 %v464, %v526
        %v528 = vpop.f32.mrf.mxu0
        %v529 = vadd.f32 %v469, %v528
        %530 = vmatmul.bf16.gmra.mxu0 %v496
        %v531 = vpop.f32.mrf.mxu0
        %v532 = vadd.f32 %v474, %v531
        %v533 = vpop.f32.mrf.mxu0
        %v534 = vadd.f32 %v479, %v533
        %535 = vdwg.mxu0
        %537 = vset.pattern.permute.xlu0 0
        %538 = vperm.xlu0 %537, %v417
        %v539 = vpop.permute.xlu0 %538
        %542 = vset.pattern.permute.xlu0 0
        %543 = vperm.xlu0 %542, %v418
        %v544 = vpop.permute.xlu0 %543
        %547 = vset.pattern.permute.xlu0 0
        %548 = vperm.xlu0 %547, %v419
        %v549 = vpop.permute.xlu0 %548
        %552 = vset.pattern.permute.xlu0 0
        %553 = vperm.xlu0 %552, %v420
        %v554 = vpop.permute.xlu0 %553
        %557 = vset.pattern.permute.xlu0 0
        %558 = vperm.xlu0 %557, %v421
        %v559 = vpop.permute.xlu0 %558
        %562 = vset.pattern.permute.xlu0 0
        %563 = vperm.xlu0 %562, %v422
        %v564 = vpop.permute.xlu0 %563
        %567 = vset.pattern.permute.xlu0 0
        %568 = vperm.xlu0 %567, %v423
        %v569 = vpop.permute.xlu0 %568
        %572 = vset.pattern.permute.xlu0 0
        %573 = vperm.xlu0 %572, %v424
        %v574 = vpop.permute.xlu0 %573
        %v584 = vunpack.c.l.b16 %v409
        %v585 = vunpack.c.l.b16 %v410
        %v586 = vunpack.c.l.b16 %v411
        %v587 = vunpack.c.l.b16 %v412
        %v588 = vunpack.c.l.b16 %v413
        %v589 = vunpack.c.l.b16 %v414
        %v590 = vunpack.c.l.b16 %v415
        %v591 = vunpack.c.l.b16 %v416
        %v592 = vpack.c.b16 %v585, %v584
        %v593 = vpack.c.b16 %v587, %v586
        %v594 = vpack.c.b16 %v589, %v588
        %v595 = vpack.c.b16 %v591, %v590
        %v597 = vsel %vm491, %v592, 0
        %v600 = vsel %vm491, %v593, 0
        %v603 = vsel %vm491, %v594, 0
        %v606 = vsel %vm491, %v595, 0
        %608 = vmatpush.bf16.msra.mxu0 0
        %609 = vmatpush.bf16.msra.mxu0 0
        %610 = vmatpush.bf16.msra.mxu0 0
        %611 = vmatpush.bf16.msra.mxu0 0
        %612 = vmatpush.bf16.msra.mxu0 0
        %613 = vmatpush.bf16.msra.mxu0 0
        %614 = vmatpush.bf16.msra.mxu0 %v459
        %615 = vmatpush.bf16.msra.mxu0 %v457
        %616 = vmatmul.bf16.gmra.mxu0 %v597
        %v617 = vpop.f32.mrf.mxu0
        %v618 = vadd.f32 %v539, %v617
        %v619 = vpop.f32.mrf.mxu0
        %v620 = vadd.f32 %v544, %v619
        %621 = vmatmul.bf16.gmra.mxu0 %v600
        %v622 = vpop.f32.mrf.mxu0
        %v623 = vadd.f32 %v549, %v622
        %v624 = vpop.f32.mrf.mxu0
        %v625 = vadd.f32 %v554, %v624
        %626 = vmatmul.bf16.gmra.mxu0 %v603
        %v627 = vpop.f32.mrf.mxu0
        %v628 = vadd.f32 %v559, %v627
        %v629 = vpop.f32.mrf.mxu0
        %v630 = vadd.f32 %v564, %v629
        %631 = vmatmul.bf16.gmra.mxu0 %v606
        %v632 = vpop.f32.mrf.mxu0
        %v633 = vadd.f32 %v569, %v632
        %v634 = vpop.f32.mrf.mxu0
        %v635 = vadd.f32 %v574, %v634
        %636 = vdwg.mxu0
        %637 = vmatpush.bf16.msra.mxu0 0
        %638 = vmatpush.bf16.msra.mxu0 0
        %639 = vmatpush.bf16.msra.mxu0 0
        %640 = vmatpush.bf16.msra.mxu0 0
        %641 = vmatpush.bf16.msra.mxu0 0
        %642 = vmatpush.bf16.msra.mxu0 0
        %643 = vmatpush.bf16.msra.mxu0 %v460
        %644 = vmatpush.bf16.msra.mxu0 %v458
        %645 = vmatmul.bf16.gmra.mxu0 %v597
        %v646 = vpop.f32.mrf.mxu0
        %v647 = vadd.f32 %v539, %v646
        %v648 = vpop.f32.mrf.mxu0
        %v649 = vadd.f32 %v544, %v648
        %650 = vmatmul.bf16.gmra.mxu0 %v600
        %v651 = vpop.f32.mrf.mxu0
        %v652 = vadd.f32 %v549, %v651
        %v653 = vpop.f32.mrf.mxu0
        %v654 = vadd.f32 %v554, %v653
        %655 = vmatmul.bf16.gmra.mxu0 %v603
        %v656 = vpop.f32.mrf.mxu0
        %v657 = vadd.f32 %v559, %v656
        %v658 = vpop.f32.mrf.mxu0
        %v659 = vadd.f32 %v564, %v658
        %660 = vmatmul.bf16.gmra.mxu0 %v606
        %v661 = vpop.f32.mrf.mxu0
        %v662 = vadd.f32 %v569, %v661
        %v663 = vpop.f32.mrf.mxu0
        %v664 = vadd.f32 %v574, %v663
        %665 = vdwg.mxu0
        %v666 = vmax.f32 %v618, %v647
        %667 = vmax.xlane.f32.xlu0 %v666
        %v668 = vpop.xlane.xlu0 %667
        %v669 = vmax.f32 %v620, %v649
        %670 = vmax.xlane.f32.xlu0 %v669
        %v671 = vpop.xlane.xlu0 %670
        %v672 = vmax.f32 %v623, %v652
        %673 = vmax.xlane.f32.xlu0 %v672
        %v674 = vpop.xlane.xlu0 %673
        %v675 = vmax.f32 %v625, %v654
        %676 = vmax.xlane.f32.xlu0 %v675
        %v677 = vpop.xlane.xlu0 %676
        %v678 = vsub.f32 %v618, %v668
        %v679 = vsub.f32 %v647, %v668
        %v680 = vsub.f32 %v620, %v671
        %v681 = vsub.f32 %v649, %v671
        %v682 = vsub.f32 %v623, %v674
        %v683 = vsub.f32 %v652, %v674
        %v684 = vsub.f32 %v625, %v677
        %v685 = vsub.f32 %v654, %v677
        %v686 = vmul.f32 %v678, 1.442695
        %v687 = vpow.pop %v686
        %v688 = vmul.f32 %v679, 1.442695
        %v689 = vpow.pop %v688
        %v690 = vmul.f32 %v680, 1.442695
        %v691 = vpow.pop %v690
        %v692 = vmul.f32 %v681, 1.442695
        %v693 = vpow.pop %v692
        %v694 = vmul.f32 %v682, 1.442695
        %v695 = vpow.pop %v694
        %v696 = vmul.f32 %v683, 1.442695
        %v697 = vpow.pop %v696
        %v698 = vmul.f32 %v684, 1.442695
        %v699 = vpow.pop %v698
        %v700 = vmul.f32 %v685, 1.442695
        %v701 = vpow.pop %v700
        %v702 = vadd.f32 %v687, %v689
        %703 = vadd.xlane.f32.xlu0 %v702
        %v704 = vpop.xlane.xlu0 %703
        %v705 = vadd.f32 %v691, %v693
        %706 = vadd.xlane.f32.xlu0 %v705
        %v707 = vpop.xlane.xlu0 %706
        %v708 = vadd.f32 %v695, %v697
        %709 = vadd.xlane.f32.xlu0 %v708
        %v710 = vpop.xlane.xlu0 %709
        %v711 = vadd.f32 %v699, %v701
        %712 = vadd.xlane.f32.xlu0 %v711
        %v713 = vpop.xlane.xlu0 %712
        %v714 = vrcp.pop %v704
        %v715 = vrcp.pop %v707
        %v716 = vrcp.pop %v710
        %v717 = vrcp.pop %v713
        %v718 = vmul.f32 %v687, %v714
        %v719 = vmul.f32 %v689, %v714
        %v720 = vmul.f32 %v691, %v715
        %v721 = vmul.f32 %v693, %v715
        %v722 = vmul.f32 %v695, %v716
        %v723 = vmul.f32 %v697, %v716
        %v724 = vmul.f32 %v699, %v717
        %v725 = vmul.f32 %v701, %v717
        %v726 = vmax.f32 %v508, %v510
        %v727 = vrot.slane %v726, 4
        %v728 = vmax.f32 %v726, %v727
        %v729 = vrot.slane %v728, 2
        %v730 = vmax.f32 %v728, %v729
        %v731 = vrot.slane %v730, 1
        %v732 = vmax.f32 %v730, %v731
        %v733 = vmax.f32 %v527, %v529
        %v734 = vrot.slane %v733, 4
        %v735 = vmax.f32 %v733, %v734
        %v736 = vrot.slane %v735, 2
        %v737 = vmax.f32 %v735, %v736
        %v738 = vrot.slane %v737, 1
        %v739 = vmax.f32 %v737, %v738
        %v740 = vmax.f32 %v513, %v515
        %v741 = vrot.slane %v740, 4
        %v742 = vmax.f32 %v740, %v741
        %v743 = vrot.slane %v742, 2
        %v744 = vmax.f32 %v742, %v743
        %v745 = vrot.slane %v744, 1
        %v746 = vmax.f32 %v744, %v745
        %v747 = vmax.f32 %v532, %v534
        %v748 = vrot.slane %v747, 4
        %v749 = vmax.f32 %v747, %v748
        %v750 = vrot.slane %v749, 2
        %v751 = vmax.f32 %v749, %v750
        %v752 = vrot.slane %v751, 1
        %v753 = vmax.f32 %v751, %v752
        %v754 = vsub.f32 %v508, %v732
        %v755 = vsub.f32 %v527, %v739
        %v756 = vsub.f32 %v510, %v732
        %v757 = vsub.f32 %v529, %v739
        %v758 = vsub.f32 %v513, %v746
        %v759 = vsub.f32 %v532, %v753
        %v760 = vsub.f32 %v515, %v746
        %v761 = vsub.f32 %v534, %v753
        %v762 = vmul.f32 %v754, 1.442695
        %v763 = vpow.pop %v762
        %v764 = vmul.f32 %v755, 1.442695
        %v765 = vpow.pop %v764
        %v766 = vmul.f32 %v756, 1.442695
        %v767 = vpow.pop %v766
        %v768 = vmul.f32 %v757, 1.442695
        %v769 = vpow.pop %v768
        %v770 = vmul.f32 %v758, 1.442695
        %v771 = vpow.pop %v770
        %v772 = vmul.f32 %v759, 1.442695
        %v773 = vpow.pop %v772
        %v774 = vmul.f32 %v760, 1.442695
        %v775 = vpow.pop %v774
        %v776 = vmul.f32 %v761, 1.442695
        %v777 = vpow.pop %v776
        %v778 = vadd.f32 %v763, %v767
        %v779 = vrot.slane %v778, 4
        %v780 = vadd.f32 %v778, %v779
        %v781 = vrot.slane %v780, 2
        %v782 = vadd.f32 %v780, %v781
        %v783 = vrot.slane %v782, 1
        %v784 = vadd.f32 %v782, %v783
        %v785 = vadd.f32 %v765, %v769
        %v786 = vrot.slane %v785, 4
        %v787 = vadd.f32 %v785, %v786
        %v788 = vrot.slane %v787, 2
        %v789 = vadd.f32 %v787, %v788
        %v790 = vrot.slane %v789, 1
        %v791 = vadd.f32 %v789, %v790
        %v792 = vadd.f32 %v771, %v775
        %v793 = vrot.slane %v792, 4
        %v794 = vadd.f32 %v792, %v793
        %v795 = vrot.slane %v794, 2
        %v796 = vadd.f32 %v794, %v795
        %v797 = vrot.slane %v796, 1
        %v798 = vadd.f32 %v796, %v797
        %v799 = vadd.f32 %v773, %v777
        %v800 = vrot.slane %v799, 4
        %v801 = vadd.f32 %v799, %v800
        %v802 = vrot.slane %v801, 2
        %v803 = vadd.f32 %v801, %v802
        %v804 = vrot.slane %v803, 1
        %v805 = vadd.f32 %v803, %v804
        %v806 = vrcp.pop %v784
        %v807 = vrcp.pop %v791
        %v808 = vrcp.pop %v798
        %v809 = vrcp.pop %v805
        %v810 = vmul.f32 %v763, %v806
        %v811 = vmul.f32 %v765, %v807
        %v812 = vmul.f32 %v767, %v806
        %v813 = vmul.f32 %v769, %v807
        %v814 = vmul.f32 %v771, %v808
        %v815 = vmul.f32 %v773, %v809
        %v816 = vmul.f32 %v775, %v808
        %v817 = vmul.f32 %v777, %v809
        %v818 = vpack.c.bf16 %v720, %v718
        %v819 = vpack.c.bf16 %v721, %v719
        %v820 = vpack.c.bf16 %v724, %v722
        %v821 = vpack.c.bf16 %v725, %v723
        %v822 = vpack.c.bf16 %v630, %v628
        %v823 = vpack.c.bf16 %v659, %v657
        %v824 = vpack.c.bf16 %v635, %v633
        %v825 = vpack.c.bf16 %v664, %v662
        %v826 = vpack.c.bf16 %v812, %v810
        %v827 = vpack.c.bf16 %v813, %v811
        %v828 = vpack.c.bf16 %v816, %v814
        %v829 = vpack.c.bf16 %v817, %v815
        %830 = vmatpush.bf16.xpose.msra.mxu0 0
        %831 = vmatpush.bf16.xpose.msra.mxu0 0
        %832 = vmatpush.bf16.xpose.msra.mxu0 0
        %833 = vmatpush.bf16.xpose.msra.mxu0 0
        %834 = vmatpush.bf16.xpose.msra.mxu0 0
        %835 = vmatpush.bf16.xpose.msra.mxu0 0
        %836 = vmatpush.bf16.xpose.msra.mxu0 %v824
        %837 = vmatpush.bf16.xpose.msra.mxu0 %v822
        %838 = vmatmul.bf16.gmra.mxu0 %v818
        %v839 = vpop.f32.mrf.mxu0
        %v840 = vadd.f32 0.0, %v839
        %v841 = vpop.f32.mrf.mxu0
        %v842 = vadd.f32 0.0, %v841
        %843 = vmatmul.bf16.gmra.mxu0 %v820
        %v844 = vpop.f32.mrf.mxu0
        %v845 = vadd.f32 0.0, %v844
        %v846 = vpop.f32.mrf.mxu0
        %v847 = vadd.f32 0.0, %v846
        %848 = vdwg.mxu0
        %849 = vmatpush.bf16.xpose.msra.mxu0 0
        %850 = vmatpush.bf16.xpose.msra.mxu0 0
        %851 = vmatpush.bf16.xpose.msra.mxu0 0
        %852 = vmatpush.bf16.xpose.msra.mxu0 0
        %853 = vmatpush.bf16.xpose.msra.mxu0 0
        %854 = vmatpush.bf16.xpose.msra.mxu0 0
        %855 = vmatpush.bf16.xpose.msra.mxu0 %v825
        %856 = vmatpush.bf16.xpose.msra.mxu0 %v823
        %857 = vmatmul.bf16.gmra.mxu0 %v819
        %v858 = vpop.f32.mrf.mxu0
        %v859 = vadd.f32 %v840, %v858
        %v860 = vpop.f32.mrf.mxu0
        %v861 = vadd.f32 %v842, %v860
        %862 = vmatmul.bf16.gmra.mxu0 %v821
        %v863 = vpop.f32.mrf.mxu0
        %v864 = vadd.f32 %v845, %v863
        %v865 = vpop.f32.mrf.mxu0
        %v866 = vadd.f32 %v847, %v865
        %867 = vdwg.mxu0
        %v868 = vmul.f32 %v859, %v433
        %v869 = vmul.f32 %v861, %v434
        %v870 = vmul.f32 %v864, %v435
        %v871 = vmul.f32 %v866, %v436
        %v872 = vpack.c.bf16 %v869, %v868
        %v873 = vpack.c.bf16 %v871, %v870
        %874 = vxpose.xlu0.c.b16.start [1/8] %v872, 128
        %875 = vxpose.xlu0.c.b16.cont [2/8] %v873, 128
        %876 = vxpose.xlu0.c.b16.cont [3/8] 0, 128
        %877 = vxpose.xlu0.c.b16.cont [4/8] 0, 128
        %878 = vxpose.xlu0.c.b16.cont [5/8] 0, 128
        %879 = vxpose.xlu0.c.b16.cont [6/8] 0, 128
        %880 = vxpose.xlu0.c.b16.cont [7/8] 0, 128
        %881 = vxpose.xlu0.c.b16.end [8/8] 0, 128
        %v882 = vpop.trf.xlu0
        %v883 = vpop.trf.xlu0
        %v884 = vpop.trf.xlu0
        %v885 = vpop.trf.xlu0
        %v886 = vpop.trf.xlu0
        %v887 = vpop.trf.xlu0
        %v888 = vpop.trf.xlu0
        %v889 = vpop.trf.xlu0
        %v891 = vsel %vm491, %v882, 0
        %v894 = vsel %vm491, %v883, 0
        %896 = vmatpush.bf16.msra.mxu0 0
        %897 = vmatpush.bf16.msra.mxu0 0
        %898 = vmatpush.bf16.msra.mxu0 0
        %899 = vmatpush.bf16.msra.mxu0 0
        %900 = vmatpush.bf16.msra.mxu0 0
        %901 = vmatpush.bf16.msra.mxu0 0
        %902 = vmatpush.bf16.msra.mxu0 %v828
        %903 = vmatpush.bf16.msra.mxu0 %v826
        %904 = vmatmul.bf16.gmra.mxu0 %v891
        %v905 = vpop.f32.mrf.mxu0
        %v906 = vadd.f32 0.0, %v905
        %v907 = vpop.f32.mrf.mxu0
        %v908 = vadd.f32 0.0, %v907
        %909 = vmatmul.bf16.gmra.mxu0 %v894
        %v910 = vpop.f32.mrf.mxu0
        %v911 = vadd.f32 0.0, %v910
        %v912 = vpop.f32.mrf.mxu0
        %v913 = vadd.f32 0.0, %v912
        %914 = vdwg.mxu0
        %915 = vmatpush.bf16.msra.mxu0 0
        %916 = vmatpush.bf16.msra.mxu0 0
        %917 = vmatpush.bf16.msra.mxu0 0
        %918 = vmatpush.bf16.msra.mxu0 0
        %919 = vmatpush.bf16.msra.mxu0 0
        %920 = vmatpush.bf16.msra.mxu0 0
        %921 = vmatpush.bf16.msra.mxu0 %v829
        %922 = vmatpush.bf16.msra.mxu0 %v827
        %923 = vmatmul.bf16.gmra.mxu0 %v891
        %v924 = vpop.f32.mrf.mxu0
        %v925 = vadd.f32 0.0, %v924
        %v926 = vpop.f32.mrf.mxu0
        %v927 = vadd.f32 0.0, %v926
        %928 = vmatmul.bf16.gmra.mxu0 %v894
        %v929 = vpop.f32.mrf.mxu0
        %v930 = vadd.f32 0.0, %v929
        %v931 = vpop.f32.mrf.mxu0
        %v932 = vadd.f32 0.0, %v931
        %933 = vdwg.mxu0
        %v934 = vpack.c.bf16 %v908, %v906
        %v935 = vpack.c.bf16 %v927, %v925
        %v936 = vpack.c.bf16 %v913, %v911
        %v937 = vpack.c.bf16 %v932, %v930
        %939 = vset.pattern.permute.xlu0 0
        %940 = vperm.xlu0 %939, %v429
        %v941 = vpop.permute.xlu0 %940
        %944 = vset.pattern.permute.xlu0 0
        %945 = vperm.xlu0 %944, %v430
        %v946 = vpop.permute.xlu0 %945
        %949 = vset.pattern.permute.xlu0 0
        %950 = vperm.xlu0 %949, %v431
        %v951 = vpop.permute.xlu0 %950
        %954 = vset.pattern.permute.xlu0 0
        %955 = vperm.xlu0 %954, %v432
        %v956 = vpop.permute.xlu0 %955
        %v962 = vunpack.c.l.b16 %v425
        %v963 = vunpack.c.l.b16 %v426
        %v964 = vunpack.c.l.b16 %v427
        %v965 = vunpack.c.l.b16 %v428
        %v966 = vpack.c.b16 %v963, %v962
        %v967 = vpack.c.b16 %v965, %v964
        %v969 = vsel %vm491, %v966, 0
        %v972 = vsel %vm491, %v967, 0
        %974 = vmatpush.bf16.msra.mxu0 0
        %975 = vmatpush.bf16.msra.mxu0 0
        %976 = vmatpush.bf16.msra.mxu0 0
        %977 = vmatpush.bf16.msra.mxu0 0
        %978 = vmatpush.bf16.msra.mxu0 0
        %979 = vmatpush.bf16.msra.mxu0 0
        %980 = vmatpush.bf16.msra.mxu0 %v936
        %981 = vmatpush.bf16.msra.mxu0 %v934
        %982 = vmatmul.bf16.gmra.mxu0 %v969
        %v983 = vpop.f32.mrf.mxu0
        %v984 = vadd.f32 %v941, %v983
        %v985 = vpop.f32.mrf.mxu0
        %v986 = vadd.f32 %v946, %v985
        %987 = vmatmul.bf16.gmra.mxu0 %v972
        %v988 = vpop.f32.mrf.mxu0
        %v989 = vadd.f32 %v951, %v988
        %v990 = vpop.f32.mrf.mxu0
        %v991 = vadd.f32 %v956, %v990
        %992 = vdwg.mxu0
        %993 = vmatpush.bf16.msra.mxu0 0
        %994 = vmatpush.bf16.msra.mxu0 0
        %995 = vmatpush.bf16.msra.mxu0 0
        %996 = vmatpush.bf16.msra.mxu0 0
        %997 = vmatpush.bf16.msra.mxu0 0
        %998 = vmatpush.bf16.msra.mxu0 0
        %999 = vmatpush.bf16.msra.mxu0 %v937
        %1000 = vmatpush.bf16.msra.mxu0 %v935
        %1001 = vmatmul.bf16.gmra.mxu0 %v969
        %v1002 = vpop.f32.mrf.mxu0
        %v1003 = vadd.f32 %v941, %v1002
        %v1004 = vpop.f32.mrf.mxu0
        %v1005 = vadd.f32 %v946, %v1004
        %1006 = vmatmul.bf16.gmra.mxu0 %v972
        %v1007 = vpop.f32.mrf.mxu0
        %v1008 = vadd.f32 %v951, %v1007
        %v1009 = vpop.f32.mrf.mxu0
        %v1010 = vadd.f32 %v956, %v1009
        %1011 = vdwg.mxu0
        %1012 = vst [vmem:[%s396] sm:$0xff] %v984
        %1013 = vst [vmem:[%s396 + $0x8] sm:$0xff] %v1003
        %1014 = vst [vmem:[%s396 + $0x10] sm:$0xff] %v986
        %1015 = vst [vmem:[%s396 + $0x18] sm:$0xff] %v1005
        %1016 = vst [vmem:[%s396 + $0x20] sm:$0xff] %v989
        %1017 = vst [vmem:[%s396 + $0x28] sm:$0xff] %v1008
        %1018 = vst [vmem:[%s396 + $0x30] sm:$0xff] %v991
        %1019 = vst [vmem:[%s396 + $0x38] sm:$0xff] %v1010
        %s1020 = scalar_lea.vmem %s346, 64 [#allocation2]
        %v1021 = vld [vmem:[%s1020] sm:$0xff]
        %v1022 = vld [vmem:[%s1020 + $0x8] sm:$0xff]
        %v1023 = vld [vmem:[%s1020 + $0x10] sm:$0xff]
        %v1024 = vld [vmem:[%s1020 + $0x18] sm:$0xff]
        %v1025 = vld [vmem:[%s1020 + $0x20] sm:$0xff]
        %v1026 = vld [vmem:[%s1020 + $0x28] sm:$0xff]
        %v1027 = vld [vmem:[%s1020 + $0x30] sm:$0xff]
        %v1028 = vld [vmem:[%s1020 + $0x38] sm:$0xff]
        %v1029 = vpack.c.bf16 %v1023, %v1021
        %v1030 = vpack.c.bf16 %v1024, %v1022
        %v1031 = vpack.c.bf16 %v1027, %v1025
        %v1032 = vpack.c.bf16 %v1028, %v1026
        %s1033 = scalar_lea.vmem %s356, 64 [#allocation5]
        %v1034 = vld [vmem:[%s1033] sm:$0xff]
        %v1035 = vld [vmem:[%s1033 + $0x8] sm:$0xff]
        %v1036 = vld [vmem:[%s1033 + $0x10] sm:$0xff]
        %v1037 = vld [vmem:[%s1033 + $0x18] sm:$0xff]
        %v1038 = vld [vmem:[%s1033 + $0x20] sm:$0xff]
        %v1039 = vld [vmem:[%s1033 + $0x28] sm:$0xff]
        %v1040 = vld [vmem:[%s1033 + $0x30] sm:$0xff]
        %v1041 = vld [vmem:[%s1033 + $0x38] sm:$0xff]
        %v1042 = vpack.c.bf16 %v1036, %v1034
        %v1043 = vpack.c.bf16 %v1037, %v1035
        %v1044 = vpack.c.bf16 %v1040, %v1038
        %v1045 = vpack.c.bf16 %v1041, %v1039
        %1046 = vmatpush.bf16.msra.mxu0 0
        %1047 = vmatpush.bf16.msra.mxu0 0
        %1048 = vmatpush.bf16.msra.mxu0 0
        %1049 = vmatpush.bf16.msra.mxu0 0
        %1050 = vmatpush.bf16.msra.mxu0 0
        %1051 = vmatpush.bf16.msra.mxu0 0
        %1052 = vmatpush.bf16.msra.mxu0 %v1031
        %1053 = vmatpush.bf16.msra.mxu0 %v1029
        %1054 = vmatmul.bf16.gmra.mxu0 %v493
        %v1055 = vpop.f32.mrf.mxu0
        %v1056 = vadd.f32 %v464, %v1055
        %v1057 = vpop.f32.mrf.mxu0
        %v1058 = vadd.f32 %v469, %v1057
        %1059 = vmatmul.bf16.gmra.mxu0 %v496
        %v1060 = vpop.f32.mrf.mxu0
        %v1061 = vadd.f32 %v474, %v1060
        %v1062 = vpop.f32.mrf.mxu0
        %v1063 = vadd.f32 %v479, %v1062
        %1064 = vdwg.mxu0
        %1065 = vmatpush.bf16.msra.mxu0 0
        %1066 = vmatpush.bf16.msra.mxu0 0
        %1067 = vmatpush.bf16.msra.mxu0 0
        %1068 = vmatpush.bf16.msra.mxu0 0
        %1069 = vmatpush.bf16.msra.mxu0 0
        %1070 = vmatpush.bf16.msra.mxu0 0
        %1071 = vmatpush.bf16.msra.mxu0 %v1032
        %1072 = vmatpush.bf16.msra.mxu0 %v1030
        %1073 = vmatmul.bf16.gmra.mxu0 %v493
        %v1074 = vpop.f32.mrf.mxu0
        %v1075 = vadd.f32 %v464, %v1074
        %v1076 = vpop.f32.mrf.mxu0
        %v1077 = vadd.f32 %v469, %v1076
        %1078 = vmatmul.bf16.gmra.mxu0 %v496
        %v1079 = vpop.f32.mrf.mxu0
        %v1080 = vadd.f32 %v474, %v1079
        %v1081 = vpop.f32.mrf.mxu0
        %v1082 = vadd.f32 %v479, %v1081
        %1083 = vdwg.mxu0
        %1084 = vmatpush.bf16.msra.mxu0 0
        %1085 = vmatpush.bf16.msra.mxu0 0
        %1086 = vmatpush.bf16.msra.mxu0 0
        %1087 = vmatpush.bf16.msra.mxu0 0
        %1088 = vmatpush.bf16.msra.mxu0 0
        %1089 = vmatpush.bf16.msra.mxu0 0
        %1090 = vmatpush.bf16.msra.mxu0 %v1044
        %1091 = vmatpush.bf16.msra.mxu0 %v1042
        %1092 = vmatmul.bf16.gmra.mxu0 %v597
        %v1093 = vpop.f32.mrf.mxu0
        %v1094 = vadd.f32 %v539, %v1093
        %v1095 = vpop.f32.mrf.mxu0
        %v1096 = vadd.f32 %v544, %v1095
        %1097 = vmatmul.bf16.gmra.mxu0 %v600
        %v1098 = vpop.f32.mrf.mxu0
        %v1099 = vadd.f32 %v549, %v1098
        %v1100 = vpop.f32.mrf.mxu0
        %v1101 = vadd.f32 %v554, %v1100
        %1102 = vmatmul.bf16.gmra.mxu0 %v603
        %v1103 = vpop.f32.mrf.mxu0
        %v1104 = vadd.f32 %v559, %v1103
        %v1105 = vpop.f32.mrf.mxu0
        %v1106 = vadd.f32 %v564, %v1105
        %1107 = vmatmul.bf16.gmra.mxu0 %v606
        %v1108 = vpop.f32.mrf.mxu0
        %v1109 = vadd.f32 %v569, %v1108
        %v1110 = vpop.f32.mrf.mxu0
        %v1111 = vadd.f32 %v574, %v1110
        %1112 = vdwg.mxu0
        %1113 = vmatpush.bf16.msra.mxu0 0
        %1114 = vmatpush.bf16.msra.mxu0 0
        %1115 = vmatpush.bf16.msra.mxu0 0
        %1116 = vmatpush.bf16.msra.mxu0 0
        %1117 = vmatpush.bf16.msra.mxu0 0
        %1118 = vmatpush.bf16.msra.mxu0 0
        %1119 = vmatpush.bf16.msra.mxu0 %v1045
        %1120 = vmatpush.bf16.msra.mxu0 %v1043
        %1121 = vmatmul.bf16.gmra.mxu0 %v597
        %v1122 = vpop.f32.mrf.mxu0
        %v1123 = vadd.f32 %v539, %v1122
        %v1124 = vpop.f32.mrf.mxu0
        %v1125 = vadd.f32 %v544, %v1124
        %1126 = vmatmul.bf16.gmra.mxu0 %v600
        %v1127 = vpop.f32.mrf.mxu0
        %v1128 = vadd.f32 %v549, %v1127
        %v1129 = vpop.f32.mrf.mxu0
        %v1130 = vadd.f32 %v554, %v1129
        %1131 = vmatmul.bf16.gmra.mxu0 %v603
        %v1132 = vpop.f32.mrf.mxu0
        %v1133 = vadd.f32 %v559, %v1132
        %v1134 = vpop.f32.mrf.mxu0
        %v1135 = vadd.f32 %v564, %v1134
        %1136 = vmatmul.bf16.gmra.mxu0 %v606
        %v1137 = vpop.f32.mrf.mxu0
        %v1138 = vadd.f32 %v569, %v1137
        %v1139 = vpop.f32.mrf.mxu0
        %v1140 = vadd.f32 %v574, %v1139
        %1141 = vdwg.mxu0
        %v1142 = vmax.f32 %v1094, %v1123
        %1143 = vmax.xlane.f32.xlu0 %v1142
        %v1144 = vpop.xlane.xlu0 %1143
        %v1145 = vmax.f32 %v1096, %v1125
        %1146 = vmax.xlane.f32.xlu0 %v1145
        %v1147 = vpop.xlane.xlu0 %1146
        %v1148 = vmax.f32 %v1099, %v1128
        %1149 = vmax.xlane.f32.xlu0 %v1148
        %v1150 = vpop.xlane.xlu0 %1149
        %v1151 = vmax.f32 %v1101, %v1130
        %1152 = vmax.xlane.f32.xlu0 %v1151
        %v1153 = vpop.xlane.xlu0 %1152
        %v1154 = vsub.f32 %v1094, %v1144
        %v1155 = vsub.f32 %v1123, %v1144
        %v1156 = vsub.f32 %v1096, %v1147
        %v1157 = vsub.f32 %v1125, %v1147
        %v1158 = vsub.f32 %v1099, %v1150
        %v1159 = vsub.f32 %v1128, %v1150
        %v1160 = vsub.f32 %v1101, %v1153
        %v1161 = vsub.f32 %v1130, %v1153
        %v1162 = vmul.f32 %v1154, 1.442695
        %v1163 = vpow.pop %v1162
        %v1164 = vmul.f32 %v1155, 1.442695
        %v1165 = vpow.pop %v1164
        %v1166 = vmul.f32 %v1156, 1.442695
        %v1167 = vpow.pop %v1166
        %v1168 = vmul.f32 %v1157, 1.442695
        %v1169 = vpow.pop %v1168
        %v1170 = vmul.f32 %v1158, 1.442695
        %v1171 = vpow.pop %v1170
        %v1172 = vmul.f32 %v1159, 1.442695
        %v1173 = vpow.pop %v1172
        %v1174 = vmul.f32 %v1160, 1.442695
        %v1175 = vpow.pop %v1174
        %v1176 = vmul.f32 %v1161, 1.442695
        %v1177 = vpow.pop %v1176
        %v1178 = vadd.f32 %v1163, %v1165
        %1179 = vadd.xlane.f32.xlu0 %v1178
        %v1180 = vpop.xlane.xlu0 %1179
        %v1181 = vadd.f32 %v1167, %v1169
        %1182 = vadd.xlane.f32.xlu0 %v1181
        %v1183 = vpop.xlane.xlu0 %1182
        %v1184 = vadd.f32 %v1171, %v1173
        %1185 = vadd.xlane.f32.xlu0 %v1184
        %v1186 = vpop.xlane.xlu0 %1185
        %v1187 = vadd.f32 %v1175, %v1177
        %1188 = vadd.xlane.f32.xlu0 %v1187
        %v1189 = vpop.xlane.xlu0 %1188
        %v1190 = vrcp.pop %v1180
        %v1191 = vrcp.pop %v1183
        %v1192 = vrcp.pop %v1186
        %v1193 = vrcp.pop %v1189
        %v1194 = vmul.f32 %v1163, %v1190
        %v1195 = vmul.f32 %v1165, %v1190
        %v1196 = vmul.f32 %v1167, %v1191
        %v1197 = vmul.f32 %v1169, %v1191
        %v1198 = vmul.f32 %v1171, %v1192
        %v1199 = vmul.f32 %v1173, %v1192
        %v1200 = vmul.f32 %v1175, %v1193
        %v1201 = vmul.f32 %v1177, %v1193
        %v1202 = vmax.f32 %v1056, %v1058
        %v1203 = vrot.slane %v1202, 4
        %v1204 = vmax.f32 %v1202, %v1203
        %v1205 = vrot.slane %v1204, 2
        %v1206 = vmax.f32 %v1204, %v1205
        %v1207 = vrot.slane %v1206, 1
        %v1208 = vmax.f32 %v1206, %v1207
        %v1209 = vmax.f32 %v1075, %v1077
        %v1210 = vrot.slane %v1209, 4
        %v1211 = vmax.f32 %v1209, %v1210
        %v1212 = vrot.slane %v1211, 2
        %v1213 = vmax.f32 %v1211, %v1212
        %v1214 = vrot.slane %v1213, 1
        %v1215 = vmax.f32 %v1213, %v1214
        %v1216 = vmax.f32 %v1061, %v1063
        %v1217 = vrot.slane %v1216, 4
        %v1218 = vmax.f32 %v1216, %v1217
        %v1219 = vrot.slane %v1218, 2
        %v1220 = vmax.f32 %v1218, %v1219
        %v1221 = vrot.slane %v1220, 1
        %v1222 = vmax.f32 %v1220, %v1221
        %v1223 = vmax.f32 %v1080, %v1082
        %v1224 = vrot.slane %v1223, 4
        %v1225 = vmax.f32 %v1223, %v1224
        %v1226 = vrot.slane %v1225, 2
        %v1227 = vmax.f32 %v1225, %v1226
        %v1228 = vrot.slane %v1227, 1
        %v1229 = vmax.f32 %v1227, %v1228
        %v1230 = vsub.f32 %v1056, %v1208
        %v1231 = vsub.f32 %v1075, %v1215
        %v1232 = vsub.f32 %v1058, %v1208
        %v1233 = vsub.f32 %v1077, %v1215
        %v1234 = vsub.f32 %v1061, %v1222
        %v1235 = vsub.f32 %v1080, %v1229
        %v1236 = vsub.f32 %v1063, %v1222
        %v1237 = vsub.f32 %v1082, %v1229
        %v1238 = vmul.f32 %v1230, 1.442695
        %v1239 = vpow.pop %v1238
        %v1240 = vmul.f32 %v1231, 1.442695
        %v1241 = vpow.pop %v1240
        %v1242 = vmul.f32 %v1232, 1.442695
        %v1243 = vpow.pop %v1242
        %v1244 = vmul.f32 %v1233, 1.442695
        %v1245 = vpow.pop %v1244
        %v1246 = vmul.f32 %v1234, 1.442695
        %v1247 = vpow.pop %v1246
        %v1248 = vmul.f32 %v1235, 1.442695
        %v1249 = vpow.pop %v1248
        %v1250 = vmul.f32 %v1236, 1.442695
        %v1251 = vpow.pop %v1250
        %v1252 = vmul.f32 %v1237, 1.442695
        %v1253 = vpow.pop %v1252
        %v1254 = vadd.f32 %v1239, %v1243
        %v1255 = vrot.slane %v1254, 4
        %v1256 = vadd.f32 %v1254, %v1255
        %v1257 = vrot.slane %v1256, 2
        %v1258 = vadd.f32 %v1256, %v1257
        %v1259 = vrot.slane %v1258, 1
        %v1260 = vadd.f32 %v1258, %v1259
        %v1261 = vadd.f32 %v1241, %v1245
        %v1262 = vrot.slane %v1261, 4
        %v1263 = vadd.f32 %v1261, %v1262
        %v1264 = vrot.slane %v1263, 2
        %v1265 = vadd.f32 %v1263, %v1264
        %v1266 = vrot.slane %v1265, 1
        %v1267 = vadd.f32 %v1265, %v1266
        %v1268 = vadd.f32 %v1247, %v1251
        %v1269 = vrot.slane %v1268, 4
        %v1270 = vadd.f32 %v1268, %v1269
        %v1271 = vrot.slane %v1270, 2
        %v1272 = vadd.f32 %v1270, %v1271
        %v1273 = vrot.slane %v1272, 1
        %v1274 = vadd.f32 %v1272, %v1273
        %v1275 = vadd.f32 %v1249, %v1253
        %v1276 = vrot.slane %v1275, 4
        %v1277 = vadd.f32 %v1275, %v1276
        %v1278 = vrot.slane %v1277, 2
        %v1279 = vadd.f32 %v1277, %v1278
        %v1280 = vrot.slane %v1279, 1
        %v1281 = vadd.f32 %v1279, %v1280
        %v1282 = vrcp.pop %v1260
        %v1283 = vrcp.pop %v1267
        %v1284 = vrcp.pop %v1274
        %v1285 = vrcp.pop %v1281
        %v1286 = vmul.f32 %v1239, %v1282
        %v1287 = vmul.f32 %v1241, %v1283
        %v1288 = vmul.f32 %v1243, %v1282
        %v1289 = vmul.f32 %v1245, %v1283
        %v1290 = vmul.f32 %v1247, %v1284
        %v1291 = vmul.f32 %v1249, %v1285
        %v1292 = vmul.f32 %v1251, %v1284
        %v1293 = vmul.f32 %v1253, %v1285
        %v1294 = vpack.c.bf16 %v1196, %v1194
        %v1295 = vpack.c.bf16 %v1197, %v1195
        %v1296 = vpack.c.bf16 %v1200, %v1198
        %v1297 = vpack.c.bf16 %v1201, %v1199
        %v1298 = vpack.c.bf16 %v1106, %v1104
        %v1299 = vpack.c.bf16 %v1135, %v1133
        %v1300 = vpack.c.bf16 %v1111, %v1109
        %v1301 = vpack.c.bf16 %v1140, %v1138
        %v1302 = vpack.c.bf16 %v1288, %v1286
        %v1303 = vpack.c.bf16 %v1289, %v1287
        %v1304 = vpack.c.bf16 %v1292, %v1290
        %v1305 = vpack.c.bf16 %v1293, %v1291
        %1306 = vmatpush.bf16.xpose.msra.mxu0 0
        %1307 = vmatpush.bf16.xpose.msra.mxu0 0
        %1308 = vmatpush.bf16.xpose.msra.mxu0 0
        %1309 = vmatpush.bf16.xpose.msra.mxu0 0
        %1310 = vmatpush.bf16.xpose.msra.mxu0 0
        %1311 = vmatpush.bf16.xpose.msra.mxu0 0
        %1312 = vmatpush.bf16.xpose.msra.mxu0 %v1300
        %1313 = vmatpush.bf16.xpose.msra.mxu0 %v1298
        %1314 = vmatmul.bf16.gmra.mxu0 %v1294
        %v1315 = vpop.f32.mrf.mxu0
        %v1316 = vadd.f32 0.0, %v1315
        %v1317 = vpop.f32.mrf.mxu0
        %v1318 = vadd.f32 0.0, %v1317
        %1319 = vmatmul.bf16.gmra.mxu0 %v1296
        %v1320 = vpop.f32.mrf.mxu0
        %v1321 = vadd.f32 0.0, %v1320
        %v1322 = vpop.f32.mrf.mxu0
        %v1323 = vadd.f32 0.0, %v1322
        %1324 = vdwg.mxu0
        %1325 = vmatpush.bf16.xpose.msra.mxu0 0
        %1326 = vmatpush.bf16.xpose.msra.mxu0 0
        %1327 = vmatpush.bf16.xpose.msra.mxu0 0
        %1328 = vmatpush.bf16.xpose.msra.mxu0 0
        %1329 = vmatpush.bf16.xpose.msra.mxu0 0
        %1330 = vmatpush.bf16.xpose.msra.mxu0 0
        %1331 = vmatpush.bf16.xpose.msra.mxu0 %v1301
        %1332 = vmatpush.bf16.xpose.msra.mxu0 %v1299
        %1333 = vmatmul.bf16.gmra.mxu0 %v1295
        %v1334 = vpop.f32.mrf.mxu0
        %v1335 = vadd.f32 %v1316, %v1334
        %v1336 = vpop.f32.mrf.mxu0
        %v1337 = vadd.f32 %v1318, %v1336
        %1338 = vmatmul.bf16.gmra.mxu0 %v1297
        %v1339 = vpop.f32.mrf.mxu0
        %v1340 = vadd.f32 %v1321, %v1339
        %v1341 = vpop.f32.mrf.mxu0
        %v1342 = vadd.f32 %v1323, %v1341
        %1343 = vdwg.mxu0
        %v1344 = vmul.f32 %v1335, %v433
        %v1345 = vmul.f32 %v1337, %v434
        %v1346 = vmul.f32 %v1340, %v435
        %v1347 = vmul.f32 %v1342, %v436
        %v1348 = vpack.c.bf16 %v1345, %v1344
        %v1349 = vpack.c.bf16 %v1347, %v1346
        %1350 = vxpose.xlu0.c.b16.start [1/8] %v1348, 128
        %1351 = vxpose.xlu0.c.b16.cont [2/8] %v1349, 128
        %1352 = vxpose.xlu0.c.b16.cont [3/8] 0, 128
        %1353 = vxpose.xlu0.c.b16.cont [4/8] 0, 128
        %1354 = vxpose.xlu0.c.b16.cont [5/8] 0, 128
        %1355 = vxpose.xlu0.c.b16.cont [6/8] 0, 128
        %1356 = vxpose.xlu0.c.b16.cont [7/8] 0, 128
        %1357 = vxpose.xlu0.c.b16.end [8/8] 0, 128
        %v1358 = vpop.trf.xlu0
        %v1359 = vpop.trf.xlu0
        %v1360 = vpop.trf.xlu0
        %v1361 = vpop.trf.xlu0
        %v1362 = vpop.trf.xlu0
        %v1363 = vpop.trf.xlu0
        %v1364 = vpop.trf.xlu0
        %v1365 = vpop.trf.xlu0
        %v1367 = vsel %vm491, %v1358, 0
        %v1370 = vsel %vm491, %v1359, 0
        %1372 = vmatpush.bf16.msra.mxu0 0
        %1373 = vmatpush.bf16.msra.mxu0 0
        %1374 = vmatpush.bf16.msra.mxu0 0
        %1375 = vmatpush.bf16.msra.mxu0 0
        %1376 = vmatpush.bf16.msra.mxu0 0
        %1377 = vmatpush.bf16.msra.mxu0 0
        %1378 = vmatpush.bf16.msra.mxu0 %v1304
        %1379 = vmatpush.bf16.msra.mxu0 %v1302
        %1380 = vmatmul.bf16.gmra.mxu0 %v1367
        %v1381 = vpop.f32.mrf.mxu0
        %v1382 = vadd.f32 0.0, %v1381
        %v1383 = vpop.f32.mrf.mxu0
        %v1384 = vadd.f32 0.0, %v1383
        %1385 = vmatmul.bf16.gmra.mxu0 %v1370
        %v1386 = vpop.f32.mrf.mxu0
        %v1387 = vadd.f32 0.0, %v1386
        %v1388 = vpop.f32.mrf.mxu0
        %v1389 = vadd.f32 0.0, %v1388
        %1390 = vdwg.mxu0
        %1391 = vmatpush.bf16.msra.mxu0 0
        %1392 = vmatpush.bf16.msra.mxu0 0
        %1393 = vmatpush.bf16.msra.mxu0 0
        %1394 = vmatpush.bf16.msra.mxu0 0
        %1395 = vmatpush.bf16.msra.mxu0 0
        %1396 = vmatpush.bf16.msra.mxu0 0
        %1397 = vmatpush.bf16.msra.mxu0 %v1305
        %1398 = vmatpush.bf16.msra.mxu0 %v1303
        %1399 = vmatmul.bf16.gmra.mxu0 %v1367
        %v1400 = vpop.f32.mrf.mxu0
        %v1401 = vadd.f32 0.0, %v1400
        %v1402 = vpop.f32.mrf.mxu0
        %v1403 = vadd.f32 0.0, %v1402
        %1404 = vmatmul.bf16.gmra.mxu0 %v1370
        %v1405 = vpop.f32.mrf.mxu0
        %v1406 = vadd.f32 0.0, %v1405
        %v1407 = vpop.f32.mrf.mxu0
        %v1408 = vadd.f32 0.0, %v1407
        %1409 = vdwg.mxu0
        %v1410 = vpack.c.bf16 %v1384, %v1382
        %v1411 = vpack.c.bf16 %v1403, %v1401
        %v1412 = vpack.c.bf16 %v1389, %v1387
        %v1413 = vpack.c.bf16 %v1408, %v1406
        %1414 = vmatpush.bf16.msra.mxu0 0
        %1415 = vmatpush.bf16.msra.mxu0 0
        %1416 = vmatpush.bf16.msra.mxu0 0
        %1417 = vmatpush.bf16.msra.mxu0 0
        %1418 = vmatpush.bf16.msra.mxu0 0
        %1419 = vmatpush.bf16.msra.mxu0 0
        %1420 = vmatpush.bf16.msra.mxu0 %v1412
        %1421 = vmatpush.bf16.msra.mxu0 %v1410
        %1422 = vmatmul.bf16.gmra.mxu0 %v969
        %v1423 = vpop.f32.mrf.mxu0
        %v1424 = vadd.f32 %v941, %v1423
        %v1425 = vpop.f32.mrf.mxu0
        %v1426 = vadd.f32 %v946, %v1425
        %1427 = vmatmul.bf16.gmra.mxu0 %v972
        %v1428 = vpop.f32.mrf.mxu0
        %v1429 = vadd.f32 %v951, %v1428
        %v1430 = vpop.f32.mrf.mxu0
        %v1431 = vadd.f32 %v956, %v1430
        %1432 = vdwg.mxu0
        %1433 = vmatpush.bf16.msra.mxu0 0
        %1434 = vmatpush.bf16.msra.mxu0 0
        %1435 = vmatpush.bf16.msra.mxu0 0
        %1436 = vmatpush.bf16.msra.mxu0 0
        %1437 = vmatpush.bf16.msra.mxu0 0
        %1438 = vmatpush.bf16.msra.mxu0 0
        %1439 = vmatpush.bf16.msra.mxu0 %v1413
        %1440 = vmatpush.bf16.msra.mxu0 %v1411
        %1441 = vmatmul.bf16.gmra.mxu0 %v969
        %v1442 = vpop.f32.mrf.mxu0
        %v1443 = vadd.f32 %v941, %v1442
        %v1444 = vpop.f32.mrf.mxu0
        %v1445 = vadd.f32 %v946, %v1444
        %1446 = vmatmul.bf16.gmra.mxu0 %v972
        %v1447 = vpop.f32.mrf.mxu0
        %v1448 = vadd.f32 %v951, %v1447
        %v1449 = vpop.f32.mrf.mxu0
        %v1450 = vadd.f32 %v956, %v1449
        %1451 = vdwg.mxu0
        %s1452 = scalar_lea.vmem %s396, 64 [#allocation7]
        %1453 = vst [vmem:[%s1452] sm:$0xff] %v1424
        %1454 = vst [vmem:[%s1452 + $0x8] sm:$0xff] %v1443
        %1455 = vst [vmem:[%s1452 + $0x10] sm:$0xff] %v1426
        %1456 = vst [vmem:[%s1452 + $0x18] sm:$0xff] %v1445
        %1457 = vst [vmem:[%s1452 + $0x20] sm:$0xff] %v1429
        %1458 = vst [vmem:[%s1452 + $0x28] sm:$0xff] %v1448
        %1459 = vst [vmem:[%s1452 + $0x30] sm:$0xff] %v1431
        %1460 = vst [vmem:[%s1452 + $0x38] sm:$0xff] %v1450
        %s1461 = sand.u32 %s236, 1
        %s1462 = scalar_lea.sflag [#allocation4], %s1461
        %s1463 = sand.u32 %s236, 1
        %s1464 = smul.addr %s1463, 128
        %s1465 = scalar_lea.vmem [#allocation7], %s1464
        // Predicated region
        $region65: #{tpu_custom_call.1} parent=55 // pred_check
          %p1466 = pneg %p246
        $region66: #{tpu_custom_call.1} parent=55 // pred_check_branch
          %1468 = sbr.rel (%p1466) target = $region68
        $region67: #{tpu_custom_call.1} parent=55 // pred_region
          %s1469 = smul.u32 2, %s29
          %1471 = vsyncadd %s1462, 0
          %s1472 = smul.addr %s1469, 8
          %s1473 = smul.addr %s1472, 8
          %s1474 = scalar_lea.hbm %s9, %s1473
          %s1475 = sshll.u32 %s1465, 4
          %s1476 = int_to_ptr.vmem [resolvable:$true] %s1475
          %s1477 = sshll.u32 %s1474, 4
          %s1478 = int_to_ptr.hbm [resolvable:$true] %s1477
          %1483 = dma.vmem_to_hbm [thread:$0]  %s1476, 2048, %s1478, %s1462, 256, 256, 16
        $region68: #{tpu_custom_call.1} parent=55 // pred_fallthru
          _
      $region56: #{tpu_custom_call.1} parent=5 // pred_fallthru
        _
      %p1484 = scmp.le.s32.totalorder 2, %s24
      // Predicated region
      $region69: #{tpu_custom_call.1} parent=5 // pred_check
        %p1485 = pneg %p1484
      $region70: #{tpu_custom_call.1} parent=5 // pred_check_branch
        %1487 = sbr.rel (%p1485) target = $region72
      $region71: #{tpu_custom_call.1} parent=5 // pred_region
        %s1488 = ssub.s32 %s24, 2
        // Predicated region
        $region73: #{tpu_custom_call.1} parent=71 // pred_check
          %p1489 = pneg %p252
        $region74: #{tpu_custom_call.1} parent=71 // pred_check_branch
          %1491 = sbr.rel (%p1489) target = $region76
        $region75: #{tpu_custom_call.1} parent=71 // pred_region
          %s1492 = sand.u32 %s237, 1
          %s1493 = scalar_lea.sflag [#allocation4], %s1492
          %s1494 = sand.u32 %s237, 1
          %s1495 = smul.addr %s1494, 128
          %s1496 = scalar_lea.vmem [#allocation7], %s1495
          %1498 = dma.done %s1493, 2048
        $region76: #{tpu_custom_call.1} parent=71 // pred_fallthru
          _
      $region72: #{tpu_custom_call.1} parent=5 // pred_fallthru
        _
    $region6: #{tpu_custom_call.1} parent=1 // loop_footer
      %s28 = sadd.s32 1, %s24
    $region7: #{tpu_custom_call.1} parent=1 // loop_footer_branch
      %23 = sbr.rel target = $region3
    $region8: #{tpu_custom_call.1} parent=1 // loop_exit
      _
    %1499 = vsyncpa [#allocation3], 1
    %s1500 = scalar_lea.sflag [#allocation3], 1
    %1501 = vsyncpa %s1500, 1
    %1502 = vsyncpa [#allocation6], 1
    %s1503 = scalar_lea.sflag [#allocation6], 1
    %1504 = vsyncpa %s1503, 1
    %1505 = vsyncpa [#allocation4], 1
    %s1506 = scalar_lea.sflag [#allocation4], 1
    %1507 = vsyncpa %s1506, 1

</llo_original>
